<compile_context>
chip_gen: v7x
topology: tpu7x:2x2x1
jax: 0.10.0
libtpu: 0.0.40
codegen_flags: <defaults>
</compile_context>

<pallas_src>
import math
from functools import partial

import jax
import jax.numpy as jnp
from jax.experimental import pallas as pl
from jax.experimental.pallas import tpu as pltpu

d_ff = 512
d_model = 128
batch_size = 4
num_nodes = 32

_INV_SQRT2 = 1.0 / math.sqrt(2.0)


# ---------------------------------------------------------------------------
# Kernel body (shared by the single-invocation and the gridded path).
# ---------------------------------------------------------------------------
def _expert_kernel(x_ref, w1_ref, b1_ref, w2_ref, b2_ref, o_ref):
    # In-kernel bf16 cast of the activation (VPU work hidden under DMA/MXU
    # slack; avoids a separate un-hidden XLA convert op per call).
    x = x_ref[...].astype(jnp.bfloat16)

    # linear1: [M, d_model](bf16) @ [d_model, d_ff](bf16) -> f32 accumulate.
    h = jnp.dot(x, w1_ref[...], preferred_element_type=jnp.float32)
    h = h + b1_ref[...]                      # b1 is [1, d_ff]; broadcasts over rows.

    # tanh-approximation GELU: the tanh lands on the EUP (otherwise idle here)
    # instead of an erf polynomial on the VALU.  ~1e-3 deviation from
    # PyTorch's exact-erf nn.GELU default.
    h = jax.nn.gelu(h, approximate=True)

    # TODO(synk): nn.Dropout is identity in eval mode; training-mode stochastic
    # dropout is intentionally not applied here.

    # Cast the live intermediate to bf16: halves vreg/VMEM pressure and feeds
    # the second matmul at native MXU bf16 rate.
    h = h.astype(jnp.bfloat16)

    # linear2: [M, d_ff](bf16) @ [d_ff, d_model](bf16) -> f32 accumulate.
    out = jnp.dot(h, w2_ref[...], preferred_element_type=jnp.float32)
    out = out + b2_ref[...]                  # b2 is [1, d_model].
    o_ref[...] = out.astype(o_ref.dtype)


# ---------------------------------------------------------------------------
# Parameter prep: done ONCE, not per call (no per-call convert HLOs).
# ---------------------------------------------------------------------------
def prepare_expert_params(w1, b1, w2, b2):
    """Cast/reshape parameters once; returns kernel-ready operands."""
    F = w1.shape[1]
    D = w2.shape[1]
    return (
        w1.astype(jnp.bfloat16),                 # [d_model, d_ff] bf16
        b1.reshape(1, F).astype(jnp.float32),    # [1, d_ff]       f32
        w2.astype(jnp.bfloat16),                 # [d_ff, d_model] bf16
        b2.reshape(1, D).astype(jnp.float32),    # [1, d_model]    f32
    )


# ---------------------------------------------------------------------------
# Wrapper.
# ---------------------------------------------------------------------------
@partial(jax.jit, static_argnames=("row_tile",))
def expert_forward(x, params, *, row_tile=256):
    """x: [B, N, d_model] f32 -> [B, N, d_model] f32."""
    w1b, b1_2, w2b, b2_2 = params
    B, N, D = x.shape
    F = w1b.shape[1]
    M = B * N

    # Metadata-only reshape (no convert): last dim stays 128 -> lane-dense.
    x2 = x.reshape(M, D)

    cost = pl.CostEstimate(
        flops=2 * M * D * F + 2 * M * F * D,            # two matmuls
        transcendentals=M * F,                          # tanh per hidden element
        bytes_accessed=(x2.size * 4 + w1b.size * 2 + w2b.size * 2
                        + b1_2.size * 4 + b2_2.size * 4 + M * D * 4),
    )
    out_shape = jax.ShapeDtypeStruct((M, D), x.dtype)

    if M < 2 * row_tile or (M % row_tile) != 0:
        # Default path (M = 128 here): single invocation, no grid, whole-array
        # VMEM residency -- no pipeline overhead, no double-buffered weights.
        in_specs = [pl.BlockSpec(memory_space=pltpu.MemorySpace.VMEM)
                    for _ in range(5)]
        out_specs = pl.BlockSpec(memory_space=pltpu.MemorySpace.VMEM)
        out = pl.pallas_call(
            _expert_kernel,
            out_shape=out_shape,
            in_specs=in_specs,
            out_specs=out_specs,
            cost_estimate=cost,
        )(x2, w1b, b1_2, w2b, b2_2)
    else:
        # Large-M path: 1-D grid over rows, marked "parallel" so v7x shards
        # the row axis across both TensorCores (weights are tiny, so per-TC
        # duplication in VMEM is a non-issue).
        grid = (M // row_tile,)
        in_specs = [
            pl.BlockSpec((row_tile, D), lambda i: (i, 0)),
            pl.BlockSpec((D, F), lambda i: (0, 0)),
            pl.BlockSpec((1, F), lambda i: (0, 0)),
            pl.BlockSpec((F, D), lambda i: (0, 0)),
            pl.BlockSpec((1, D), lambda i: (0, 0)),
        ]
        out_specs = pl.BlockSpec((row_tile, D), lambda i: (i, 0))
        out = pl.pallas_call(
            _expert_kernel,
            out_shape=out_shape,
            grid=grid,
            in_specs=in_specs,
            out_specs=out_specs,
            cost_estimate=cost,
            compiler_params=pltpu.CompilerParams(
                dimension_semantics=("parallel",)),
        )(x2, w1b, b1_2, w2b, b2_2)

    return out.reshape(B, N, D)


# ---------------------------------------------------------------------------
# Init + references.
# ---------------------------------------------------------------------------
def _init_linear(key, fan_in, fan_out, dtype=jnp.float32):
    # Mimics torch.nn.Linear's U(-1/sqrt(fan_in), 1/sqrt(fan_in)) init.
    kw, kb = jax.random.split(key)
    bound = 1.0 / math.sqrt(fan_in)
    w = jax.random.uniform(kw, (fan_in, fan_out), dtype, minval=-bound, maxval=bound)
    b = jax.random.uniform(kb, (fan_out,), dtype, minval=-bound, maxval=bound)
    return w, b


def _reference_f32(x, w1, b1, w2, b2):
    """Full-precision, exact-erf GELU (matches PyTorch nn.GELU default)."""
    h = x @ w1 + b1
    h = 0.5 * h * (1.0 + jax.lax.erf(h * _INV_SQRT2))
    return h @ w2 + b2


def _reference_quantized(x, w1, b1, w2, b2):
    """Mirrors the kernel's numerics: bf16 operands, f32 accum, tanh GELU."""
    xb = x.astype(jnp.bfloat16)
    w1b = w1.astype(jnp.bfloat16)
    w2b = w2.astype(jnp.bfloat16)
    h = jnp.dot(xb, w1b, preferred_element_type=jnp.float32) + b1
    h = jax.nn.gelu(h, approximate=True).astype(jnp.bfloat16)
    return jnp.dot(h, w2b, preferred_element_type=jnp.float32) + b2


if __name__ == "__main__":
    key = jax.random.PRNGKey(0)
    kx, k1, k2 = jax.random.split(key, 3)

    x = jax.random.normal(kx, (batch_size, num_nodes, d_model), jnp.float32)
    w1, b1 = _init_linear(k1, d_model, d_ff)
    w2, b2 = _init_linear(k2, d_ff, d_model)

    # One-time parameter prep (bf16 weights, reshaped biases).
    params = prepare_expert_params(w1, b1, w2, b2)

    out = expert_forward(x, params)
    out = jax.block_until_ready(out)
    assert out.shape == (batch_size, num_nodes, d_model)

    # Tight check vs. a reference that uses the kernel's own quantization.
    ref_q = _reference_quantized(x.reshape(-1, d_model), w1, b1, w2, b2)
    ref_q = ref_q.reshape(batch_size, num_nodes, d_model)
    assert jnp.allclose(out, ref_q, atol=2e-2, rtol=2e-2), \
        "mismatch vs bf16-quantized tanh-GELU reference"

    # Relaxed check vs. the full-f32 exact-erf PyTorch-equivalent reference
    # (covers the intentional bf16 + tanh-GELU deviations).
    ref_f = _reference_f32(x.reshape(-1, d_model), w1, b1, w2, b2)
    ref_f = ref_f.reshape(batch_size, num_nodes, d_model)
    assert jnp.allclose(out, ref_f, atol=5e-2, rtol=5e-2), \
        "mismatch vs f32 exact-erf reference"

    print("KERNEL_OK")
</pallas_src>

<mosaic_0001>
module attributes {stable_mosaic.version = 11 : i64} {
  func.func @_expert_kernel(%arg0: memref<128x128xf32, #tpu.memory_space<vmem>>, %arg1: memref<128x512xbf16, #tpu.memory_space<vmem>>, %arg2: memref<1x512xf32, #tpu.memory_space<vmem>>, %arg3: memref<512x128xbf16, #tpu.memory_space<vmem>>, %arg4: memref<1x128xf32, #tpu.memory_space<vmem>>, %arg5: memref<128x128xf32, #tpu.memory_space<vmem>>) attributes {dimension_semantics = [], scalar_prefetch = 0 : i64, scratch_operands = 0 : i64, tpu.core_type = #tpu.core_type<tc>} {
    %c0 = arith.constant 0 : index
    %c0_0 = arith.constant 0 : index
    %0 = vector.load %arg0[%c0, %c0_0] : memref<128x128xf32, #tpu.memory_space<vmem>>, vector<128x128xf32>
    %1 = arith.truncf %0 : vector<128x128xf32> to vector<128x128xbf16>
    %c0_1 = arith.constant 0 : index
    %c0_2 = arith.constant 0 : index
    %2 = vector.load %arg1[%c0_1, %c0_2] : memref<128x512xbf16, #tpu.memory_space<vmem>>, vector<128x512xbf16>
    %cst = arith.constant dense<0.000000e+00> : vector<128x512xf32>
    %3 = tpu.matmul %1, %2, %cst {dimension_numbers = #tpu.dot_dimension_numbers<[1], [0], [0], [1], [0, 0, 1, 1], [], []>} : vector<128x128xbf16>, vector<128x512xbf16>, vector<128x512xf32> -> vector<128x512xf32>
    %c0_3 = arith.constant 0 : index
    %c0_4 = arith.constant 0 : index
    %4 = vector.load %arg2[%c0_3, %c0_4] : memref<1x512xf32, #tpu.memory_space<vmem>>, vector<1x512xf32>
    %5 = vector.broadcast %4 : vector<1x512xf32> to vector<128x512xf32>
    %6 = arith.addf %3, %5 : vector<128x512xf32>
    %7 = arith.mulf %6, %6 : vector<128x512xf32>
    %8 = arith.mulf %6, %7 : vector<128x512xf32>
    %cst_5 = arith.constant 4.471500e-02 : f32
    %9 = vector.broadcast %cst_5 : f32 to vector<128x512xf32>
    %10 = arith.mulf %9, %8 : vector<128x512xf32>
    %11 = arith.addf %6, %10 : vector<128x512xf32>
    %cst_6 = arith.constant 0.797884583 : f32
    %12 = vector.broadcast %cst_6 : f32 to vector<128x512xf32>
    %13 = arith.mulf %12, %11 : vector<128x512xf32>
    %14 = math.tanh %13 : vector<128x512xf32>
    %cst_7 = arith.constant 1.000000e+00 : f32
    %15 = vector.broadcast %cst_7 : f32 to vector<128x512xf32>
    %16 = arith.addf %15, %14 : vector<128x512xf32>
    %cst_8 = arith.constant 5.000000e-01 : f32
    %17 = vector.broadcast %cst_8 : f32 to vector<128x512xf32>
    %18 = arith.mulf %17, %16 : vector<128x512xf32>
    %19 = arith.mulf %6, %18 : vector<128x512xf32>
    %20 = arith.truncf %19 : vector<128x512xf32> to vector<128x512xbf16>
    %c0_9 = arith.constant 0 : index
    %c0_10 = arith.constant 0 : index
    %21 = vector.load %arg3[%c0_9, %c0_10] : memref<512x128xbf16, #tpu.memory_space<vmem>>, vector<512x128xbf16>
    %cst_11 = arith.constant dense<0.000000e+00> : vector<128x128xf32>
    %22 = tpu.matmul %20, %21, %cst_11 {dimension_numbers = #tpu.dot_dimension_numbers<[1], [0], [0], [1], [0, 0, 1, 1], [], []>} : vector<128x512xbf16>, vector<512x128xbf16>, vector<128x128xf32> -> vector<128x128xf32>
    %c0_12 = arith.constant 0 : index
    %c0_13 = arith.constant 0 : index
    %23 = vector.load %arg4[%c0_12, %c0_13] : memref<1x128xf32, #tpu.memory_space<vmem>>, vector<1x128xf32>
    %24 = vector.broadcast %23 : vector<1x128xf32> to vector<128x128xf32>
    %25 = arith.addf %22, %24 : vector<128x128xf32>
    %c0_14 = arith.constant 0 : index
    %c0_15 = arith.constant 0 : index
    %26 = vector.load %arg5[%c0_14, %c0_15] : memref<128x128xf32, #tpu.memory_space<vmem>>, vector<128x128xf32>
    tpu.vector_store %arg5[%c0_14, %c0_15], %25 {strides = array<i32>} : memref<128x128xf32, #tpu.memory_space<vmem>>, vector<128x128xf32>,
    return
  }
}

</mosaic_0001>

<llo_original>
// kernel: expert_forward.1
$region0: #{expert_forward.1}
  #allocation0 [shape = 'u32[]', space=smem, size = 0x4, offset = 0x4, fixed_abs, tag = 'smem constant byte address 0x4 - core index']
  #allocation1 [shape = 'u32[144,128]{1,0:T(1,128)}', space=vmem, size = 0x12000, scoped, tag = 'internal scratch']
  %s0 = inlined_call_operand.hbm [shape: f32[128,128], index: 0, kind: input, shape index: {}]
  %s1 = inlined_call_operand.hbm [shape: bf16[128,512], index: 1, kind: input, shape index: {}]
  %s2 = inlined_call_operand.vmem [shape: f32[1,512], index: 2, kind: input, shape index: {}]
  %s3 = inlined_call_operand.hbm [shape: bf16[512,128], index: 3, kind: input, shape index: {}]
  %s4 = inlined_call_operand.vmem [shape: f32[1,128], index: 4, kind: input, shape index: {}]
  %s5 = inlined_call_operand.hbm [shape: f32[128,128], index: 5, kind: output, shape index: {}]
  %s6 = sld [smem:[#allocation0]]
  $region42: #{expert_forward.1} parent=0
    _
  %s8 = ssub.s32 1, %s6
  %s9 = scalar_select 0, %s8, %s6
  $region1: #{expert_forward.1} parent=0
    #allocation2 [shape = 'u8[65536]{0}', space=vmem, size = 0x10000, scoped, tag = 'input window, operand 0, single buffered']
    #allocation3 [shape = 's32[1]{0}', space=sflag, size = 0x4, scoped, tag = 'scoped memory for expert_forward.1']
    #allocation4 [shape = 's32[1]{0}', space=sflag, size = 0x4, scoped, tag = 'scoped memory for expert_forward.1']
    #allocation5 [shape = 'u8[131072]{0}', space=vmem, size = 0x20000, scoped, tag = 'input window, operand 1, single buffered']
    #allocation6 [shape = 's32[1]{0}', space=sflag, size = 0x4, scoped, tag = 'scoped memory for expert_forward.1']
    #allocation7 [shape = 'u8[131072]{0}', space=vmem, size = 0x20000, scoped, tag = 'input window, operand 3, single buffered']
    #allocation8 [shape = 'u8[65536]{0}', space=vmem, size = 0x10000, scoped, tag = 'output window, operand 0, single buffered']
    %10 = vsyncpa [#allocation3], 0
    %11 = vsyncpa [#allocation6], 0
    %12 = vsyncpa [#allocation4], 0
    // Predicated region
    $region2: #{expert_forward.1} parent=1 // pred_check
      _
    $region3: #{expert_forward.1} parent=1 // pred_check_branch
      %14 = sbr.rel (0) target = $region5
    $region4: #{expert_forward.1} parent=1 // pred_region
      %s16 = ssub.s32 2048, 2048
      %17 = vsyncadd [#allocation3], %s16
      %s18 = sshll.u32 [#allocation2], 4
      %s19 = int_to_ptr.vmem [resolvable:$true] %s18
      %24 = dma.hbm_to_vmem [thread:$0]  %s0, 2048, %s19, [#allocation3], 128, 128, 8
    $region5: #{expert_forward.1} parent=1 // pred_fallthru
      _
    // Predicated region
    $region6: #{expert_forward.1} parent=1 // pred_check
      _
    $region7: #{expert_forward.1} parent=1 // pred_check_branch
      %26 = sbr.rel (0) target = $region9
    $region8: #{expert_forward.1} parent=1 // pred_region
      %s28 = ssub.s32 4096, 4096
      %29 = vsyncadd [#allocation6], %s28
      %s30 = sshll.u32 [#allocation5], 4
      %s31 = int_to_ptr.vmem [resolvable:$true] %s30
      %36 = dma.hbm_to_vmem [thread:$0]  %s1, 4096, %s31, [#allocation6], 256, 256, 16
    $region9: #{expert_forward.1} parent=1 // pred_fallthru
      _
    // Predicated region
    $region10: #{expert_forward.1} parent=1 // pred_check
      _
    $region11: #{expert_forward.1} parent=1 // pred_check_branch
      %38 = sbr.rel (0) target = $region13
    $region12: #{expert_forward.1} parent=1 // pred_region
      _
    $region13: #{expert_forward.1} parent=1 // pred_fallthru
      _
    // Predicated region
    $region14: #{expert_forward.1} parent=1 // pred_check
      _
    $region15: #{expert_forward.1} parent=1 // pred_check_branch
      %40 = sbr.rel (0) target = $region17
    $region16: #{expert_forward.1} parent=1 // pred_region
      %s42 = ssub.s32 4096, 4096
      %43 = vsyncadd [#allocation6], %s42
      %s44 = sshll.u32 [#allocation7], 4
      %s45 = int_to_ptr.vmem [resolvable:$true] %s44
      %50 = dma.hbm_to_vmem [thread:$0]  %s3, 4096, %s45, [#allocation6], 64, 64, 4
    $region17: #{expert_forward.1} parent=1 // pred_fallthru
      _
    // Predicated region
    $region18: #{expert_forward.1} parent=1 // pred_check
      _
    $region19: #{expert_forward.1} parent=1 // pred_check_branch
      %52 = sbr.rel (0) target = $region21
    $region20: #{expert_forward.1} parent=1 // pred_region
      _
    $region21: #{expert_forward.1} parent=1 // pred_fallthru
      _
    // Predicated region
    $region22: #{expert_forward.1} parent=1 // pred_check
      _
    $region23: #{expert_forward.1} parent=1 // pred_check_branch
      %54 = sbr.rel (0) target = $region25
    $region24: #{expert_forward.1} parent=1 // pred_region
      %55 = dma.done [#allocation3], 2048
    $region25: #{expert_forward.1} parent=1 // pred_fallthru
      _
    // Predicated region
    $region26: #{expert_forward.1} parent=1 // pred_check
      _
    $region27: #{expert_forward.1} parent=1 // pred_check_branch
      %57 = sbr.rel (0) target = $region29
    $region28: #{expert_forward.1} parent=1 // pred_region
      %58 = dma.done [#allocation6], 4096
    $region29: #{expert_forward.1} parent=1 // pred_fallthru
      _
    // Predicated region
    $region30: #{expert_forward.1} parent=1 // pred_check
      _
    $region31: #{expert_forward.1} parent=1 // pred_check_branch
      %60 = sbr.rel (0) target = $region33
    $region32: #{expert_forward.1} parent=1 // pred_region
      %61 = dma.done [#allocation6], 4096
    $region33: #{expert_forward.1} parent=1 // pred_fallthru
      _
    %v63 = vld [vmem:[#allocation2] sm:$0xff]
    %v64 = vld [vmem:[#allocation2 + $0x8] sm:$0xff]
    %v65 = vld [vmem:[#allocation2 + $0x10] sm:$0xff]
    %v66 = vld [vmem:[#allocation2 + $0x18] sm:$0xff]
    %v67 = vld [vmem:[#allocation2 + $0x20] sm:$0xff]
    %v68 = vld [vmem:[#allocation2 + $0x28] sm:$0xff]
    %v69 = vld [vmem:[#allocation2 + $0x30] sm:$0xff]
    %v70 = vld [vmem:[#allocation2 + $0x38] sm:$0xff]
    %v71 = vld [vmem:[#allocation2 + $0x40] sm:$0xff]
    %v72 = vld [vmem:[#allocation2 + $0x48] sm:$0xff]
    %v73 = vld [vmem:[#allocation2 + $0x50] sm:$0xff]
    %v74 = vld [vmem:[#allocation2 + $0x58] sm:$0xff]
    %v75 = vld [vmem:[#allocation2 + $0x60] sm:$0xff]
    %v76 = vld [vmem:[#allocation2 + $0x68] sm:$0xff]
    %v77 = vld [vmem:[#allocation2 + $0x70] sm:$0xff]
    %v78 = vld [vmem:[#allocation2 + $0x78] sm:$0xff]
    %v79 = vpack.c.bf16 %v64, %v63
    %v80 = vpack.c.bf16 %v66, %v65
    %v81 = vpack.c.bf16 %v68, %v67
    %v82 = vpack.c.bf16 %v70, %v69
    %v83 = vpack.c.bf16 %v72, %v71
    %v84 = vpack.c.bf16 %v74, %v73
    %v85 = vpack.c.bf16 %v76, %v75
    %v86 = vpack.c.bf16 %v78, %v77
    %v87 = vld [vmem:[#allocation5] sm:$0xff]
    %v88 = vld [vmem:[#allocation5 + $0x8] sm:$0xff]
    %v89 = vld [vmem:[#allocation5 + $0x10] sm:$0xff]
    %v90 = vld [vmem:[#allocation5 + $0x18] sm:$0xff]
    %v91 = vld [vmem:[#allocation5 + $0x20] sm:$0xff]
    %v92 = vld [vmem:[#allocation5 + $0x28] sm:$0xff]
    %v93 = vld [vmem:[#allocation5 + $0x30] sm:$0xff]
    %v94 = vld [vmem:[#allocation5 + $0x38] sm:$0xff]
    %v95 = vld [vmem:[#allocation5 + $0x40] sm:$0xff]
    %v96 = vld [vmem:[#allocation5 + $0x48] sm:$0xff]
    %v97 = vld [vmem:[#allocation5 + $0x50] sm:$0xff]
    %v98 = vld [vmem:[#allocation5 + $0x58] sm:$0xff]
    %v99 = vld [vmem:[#allocation5 + $0x60] sm:$0xff]
    %v100 = vld [vmem:[#allocation5 + $0x68] sm:$0xff]
    %v101 = vld [vmem:[#allocation5 + $0x70] sm:$0xff]
    %v102 = vld [vmem:[#allocation5 + $0x78] sm:$0xff]
    %v103 = vld [vmem:[#allocation5 + $0x80] sm:$0xff]
    %v104 = vld [vmem:[#allocation5 + $0x88] sm:$0xff]
    %v105 = vld [vmem:[#allocation5 + $0x90] sm:$0xff]
    %v106 = vld [vmem:[#allocation5 + $0x98] sm:$0xff]
    %v107 = vld [vmem:[#allocation5 + $0xa0] sm:$0xff]
    %v108 = vld [vmem:[#allocation5 + $0xa8] sm:$0xff]
    %v109 = vld [vmem:[#allocation5 + $0xb0] sm:$0xff]
    %v110 = vld [vmem:[#allocation5 + $0xb8] sm:$0xff]
    %v111 = vld [vmem:[#allocation5 + $0xc0] sm:$0xff]
    %v112 = vld [vmem:[#allocation5 + $0xc8] sm:$0xff]
    %v113 = vld [vmem:[#allocation5 + $0xd0] sm:$0xff]
    %v114 = vld [vmem:[#allocation5 + $0xd8] sm:$0xff]
    %v115 = vld [vmem:[#allocation5 + $0xe0] sm:$0xff]
    %v116 = vld [vmem:[#allocation5 + $0xe8] sm:$0xff]
    %v117 = vld [vmem:[#allocation5 + $0xf0] sm:$0xff]
    %v118 = vld [vmem:[#allocation5 + $0xf8] sm:$0xff]
    %v119 = vld [vmem:[%s2] sm:$0xf]
    %v121 = vlaneseq
    %v122 = vshrl.u32 %v121, 7
    %v123 = vsub.s32 0, %v122
    %v124 = vrot.slane %v119, %v123
    %v125 = vlaneseq
    %v126 = vshrl.u32 %v125, 7
    %v127 = vsub.s32 1, %v126
    %v128 = vrot.slane %v119, %v127
    %v129 = vlaneseq
    %v130 = vshrl.u32 %v129, 7
    %v131 = vsub.s32 2, %v130
    %v132 = vrot.slane %v119, %v131
    %v133 = vlaneseq
    %v134 = vshrl.u32 %v133, 7
    %v135 = vsub.s32 3, %v134
    %v136 = vrot.slane %v119, %v135
    %v173 = vunpack.c.l.b16 %v87
    %v174 = vunpack.c.h.b16 %v87
    %v175 = vunpack.c.l.b16 %v88
    %v176 = vunpack.c.h.b16 %v88
    %v177 = vunpack.c.l.b16 %v89
    %v178 = vunpack.c.h.b16 %v89
    %v179 = vunpack.c.l.b16 %v90
    %v180 = vunpack.c.h.b16 %v90
    %v181 = vunpack.c.l.b16 %v91
    %v182 = vunpack.c.h.b16 %v91
    %v183 = vunpack.c.l.b16 %v92
    %v184 = vunpack.c.h.b16 %v92
    %v185 = vunpack.c.l.b16 %v93
    %v186 = vunpack.c.h.b16 %v93
    %v187 = vunpack.c.l.b16 %v94
    %v188 = vunpack.c.h.b16 %v94
    %v189 = vunpack.c.l.b16 %v95
    %v190 = vunpack.c.h.b16 %v95
    %v191 = vunpack.c.l.b16 %v96
    %v192 = vunpack.c.h.b16 %v96
    %v193 = vunpack.c.l.b16 %v97
    %v194 = vunpack.c.h.b16 %v97
    %v195 = vunpack.c.l.b16 %v98
    %v196 = vunpack.c.h.b16 %v98
    %v197 = vunpack.c.l.b16 %v99
    %v198 = vunpack.c.h.b16 %v99
    %v199 = vunpack.c.l.b16 %v100
    %v200 = vunpack.c.h.b16 %v100
    %v201 = vunpack.c.l.b16 %v101
    %v202 = vunpack.c.h.b16 %v101
    %v203 = vunpack.c.l.b16 %v102
    %v204 = vunpack.c.h.b16 %v102
    %v205 = vunpack.c.l.b16 %v103
    %v206 = vunpack.c.h.b16 %v103
    %v207 = vunpack.c.l.b16 %v104
    %v208 = vunpack.c.h.b16 %v104
    %v209 = vunpack.c.l.b16 %v105
    %v210 = vunpack.c.h.b16 %v105
    %v211 = vunpack.c.l.b16 %v106
    %v212 = vunpack.c.h.b16 %v106
    %v213 = vunpack.c.l.b16 %v107
    %v214 = vunpack.c.h.b16 %v107
    %v215 = vunpack.c.l.b16 %v108
    %v216 = vunpack.c.h.b16 %v108
    %v217 = vunpack.c.l.b16 %v109
    %v218 = vunpack.c.h.b16 %v109
    %v219 = vunpack.c.l.b16 %v110
    %v220 = vunpack.c.h.b16 %v110
    %v221 = vunpack.c.l.b16 %v111
    %v222 = vunpack.c.h.b16 %v111
    %v223 = vunpack.c.l.b16 %v112
    %v224 = vunpack.c.h.b16 %v112
    %v225 = vunpack.c.l.b16 %v113
    %v226 = vunpack.c.h.b16 %v113
    %v227 = vunpack.c.l.b16 %v114
    %v228 = vunpack.c.h.b16 %v114
    %v229 = vunpack.c.l.b16 %v115
    %v230 = vunpack.c.h.b16 %v115
    %v231 = vunpack.c.l.b16 %v116
    %v232 = vunpack.c.h.b16 %v116
    %v233 = vunpack.c.l.b16 %v117
    %v234 = vunpack.c.h.b16 %v117
    %v235 = vunpack.c.l.b16 %v118
    %v236 = vunpack.c.h.b16 %v118
    %v237 = vpack.c.b16 %v177, %v173
    %v238 = vpack.c.b16 %v178, %v174
    %v239 = vpack.c.b16 %v179, %v175
    %v240 = vpack.c.b16 %v180, %v176
    %v241 = vpack.c.b16 %v185, %v181
    %v242 = vpack.c.b16 %v186, %v182
    %v243 = vpack.c.b16 %v187, %v183
    %v244 = vpack.c.b16 %v188, %v184
    %v245 = vpack.c.b16 %v193, %v189
    %v246 = vpack.c.b16 %v194, %v190
    %v247 = vpack.c.b16 %v195, %v191
    %v248 = vpack.c.b16 %v196, %v192
    %v249 = vpack.c.b16 %v201, %v197
    %v250 = vpack.c.b16 %v202, %v198
    %v251 = vpack.c.b16 %v203, %v199
    %v252 = vpack.c.b16 %v204, %v200
    %v253 = vpack.c.b16 %v209, %v205
    %v254 = vpack.c.b16 %v210, %v206
    %v255 = vpack.c.b16 %v211, %v207
    %v256 = vpack.c.b16 %v212, %v208
    %v257 = vpack.c.b16 %v217, %v213
    %v258 = vpack.c.b16 %v218, %v214
    %v259 = vpack.c.b16 %v219, %v215
    %v260 = vpack.c.b16 %v220, %v216
    %v261 = vpack.c.b16 %v225, %v221
    %v262 = vpack.c.b16 %v226, %v222
    %v263 = vpack.c.b16 %v227, %v223
    %v264 = vpack.c.b16 %v228, %v224
    %v265 = vpack.c.b16 %v233, %v229
    %v266 = vpack.c.b16 %v234, %v230
    %v267 = vpack.c.b16 %v235, %v231
    %v268 = vpack.c.b16 %v236, %v232
    %301 = vmatprep.subr.bf16.mxu0 %v238
    %302 = vmatpush1.bf16.msra.mxu0 %v237
    %303 = vmatprep.subr.bf16.mxu0 %v242
    %304 = vmatpush1.bf16.msra.mxu0 %v241
    %305 = vmatprep.subr.bf16.mxu0 %v246
    %306 = vmatpush1.bf16.msra.mxu0 %v245
    %307 = vmatprep.subr.bf16.mxu0 %v250
    %308 = vmatpush1.bf16.msra.mxu0 %v249
    %309 = vmatprep.subr.bf16.mxu0 %v254
    %310 = vmatpush1.bf16.msra.mxu0 %v253
    %311 = vmatprep.subr.bf16.mxu0 %v258
    %312 = vmatpush1.bf16.msra.mxu0 %v257
    %313 = vmatprep.subr.bf16.mxu0 %v262
    %314 = vmatpush1.bf16.msra.mxu0 %v261
    %315 = vmatprep.subr.bf16.mxu0 %v266
    %316 = vmatpush1.bf16.msra.mxu0 %v265
    %317 = vmatprep.subr.bf16.mxu0 0
    %318 = vmatpush1.bf16.msra.mxu0 0
    %319 = vmatprep.subr.bf16.mxu0 0
    %320 = vmatpush1.bf16.msra.mxu0 0
    %321 = vmatprep.subr.bf16.mxu0 0
    %322 = vmatpush1.bf16.msra.mxu0 0
    %323 = vmatprep.subr.bf16.mxu0 0
    %324 = vmatpush1.bf16.msra.mxu0 0
    %325 = vmatprep.subr.bf16.mxu0 0
    %326 = vmatpush1.bf16.msra.mxu0 0
    %327 = vmatprep.subr.bf16.mxu0 0
    %328 = vmatpush1.bf16.msra.mxu0 0
    %329 = vmatprep.subr.bf16.mxu0 0
    %330 = vmatpush1.bf16.msra.mxu0 0
    %331 = vmatprep.subr.bf16.mxu0 0
    %332 = vmatpush1.bf16.msra.mxu0 0
    %333 = vmatprep.mubr.bf16.mxu0 0
    %334 = vmatmul.mubr.bf16.gmra.mrb[0].mxu0 %v79
    %v335 = vpop.f32.mrb[0].mxu0
    %v336 = vadd.f32 %v124, %v335
    %v337 = vpop.f32.mrb[0].mxu0
    %v338 = vadd.f32 %v128, %v337
    %v339 = vpop.f32.mrb[0].mxu0
    %v340 = vadd.f32 %v124, %v339
    %v341 = vpop.f32.mrb[0].mxu0
    %v342 = vadd.f32 %v128, %v341
    %343 = vmatprep.mubr.bf16.mxu0 0
    %344 = vmatmul.mubr.bf16.gmra.mrb[0].mxu0 %v80
    %v345 = vpop.f32.mrb[0].mxu0
    %v346 = vadd.f32 %v124, %v345
    %v347 = vpop.f32.mrb[0].mxu0
    %v348 = vadd.f32 %v128, %v347
    %v349 = vpop.f32.mrb[0].mxu0
    %v350 = vadd.f32 %v124, %v349
    %v351 = vpop.f32.mrb[0].mxu0
    %v352 = vadd.f32 %v128, %v351
    %353 = vmatprep.mubr.bf16.mxu0 0
    %354 = vmatmul.mubr.bf16.gmra.mrb[0].mxu0 %v81
    %v355 = vpop.f32.mrb[0].mxu0
    %v356 = vadd.f32 %v124, %v355
    %v357 = vpop.f32.mrb[0].mxu0
    %v358 = vadd.f32 %v128, %v357
    %v359 = vpop.f32.mrb[0].mxu0
    %v360 = vadd.f32 %v124, %v359
    %v361 = vpop.f32.mrb[0].mxu0
    %v362 = vadd.f32 %v128, %v361
    %363 = vmatprep.mubr.bf16.mxu0 0
    %364 = vmatmul.mubr.bf16.gmra.mrb[0].mxu0 %v82
    %v365 = vpop.f32.mrb[0].mxu0
    %v366 = vadd.f32 %v124, %v365
    %v367 = vpop.f32.mrb[0].mxu0
    %v368 = vadd.f32 %v128, %v367
    %v369 = vpop.f32.mrb[0].mxu0
    %v370 = vadd.f32 %v124, %v369
    %v371 = vpop.f32.mrb[0].mxu0
    %v372 = vadd.f32 %v128, %v371
    %373 = vmatprep.mubr.bf16.mxu0 0
    %374 = vmatmul.mubr.bf16.gmra.mrb[0].mxu0 %v83
    %v375 = vpop.f32.mrb[0].mxu0
    %v376 = vadd.f32 %v124, %v375
    %v377 = vpop.f32.mrb[0].mxu0
    %v378 = vadd.f32 %v128, %v377
    %v379 = vpop.f32.mrb[0].mxu0
    %v380 = vadd.f32 %v124, %v379
    %v381 = vpop.f32.mrb[0].mxu0
    %v382 = vadd.f32 %v128, %v381
    %383 = vmatprep.mubr.bf16.mxu0 0
    %384 = vmatmul.mubr.bf16.gmra.mrb[0].mxu0 %v84
    %v385 = vpop.f32.mrb[0].mxu0
    %v386 = vadd.f32 %v124, %v385
    %v387 = vpop.f32.mrb[0].mxu0
    %v388 = vadd.f32 %v128, %v387
    %v389 = vpop.f32.mrb[0].mxu0
    %v390 = vadd.f32 %v124, %v389
    %v391 = vpop.f32.mrb[0].mxu0
    %v392 = vadd.f32 %v128, %v391
    %393 = vmatprep.mubr.bf16.mxu0 0
    %394 = vmatmul.mubr.bf16.gmra.mrb[0].mxu0 %v85
    %v395 = vpop.f32.mrb[0].mxu0
    %v396 = vadd.f32 %v124, %v395
    %v397 = vpop.f32.mrb[0].mxu0
    %v398 = vadd.f32 %v128, %v397
    %v399 = vpop.f32.mrb[0].mxu0
    %v400 = vadd.f32 %v124, %v399
    %v401 = vpop.f32.mrb[0].mxu0
    %v402 = vadd.f32 %v128, %v401
    %403 = vmatprep.mubr.bf16.mxu0 0
    %404 = vmatmul.mubr.bf16.gmra.mrb[0].mxu0 %v86
    %v405 = vpop.f32.mrb[0].mxu0
    %v406 = vadd.f32 %v124, %v405
    %v407 = vpop.f32.mrb[0].mxu0
    %v408 = vadd.f32 %v128, %v407
    %v409 = vpop.f32.mrb[0].mxu0
    %v410 = vadd.f32 %v124, %v409
    %v411 = vpop.f32.mrb[0].mxu0
    %v412 = vadd.f32 %v128, %v411
    %413 = vdwg.mxu0
    %414 = vmatprep.subr.bf16.mxu0 %v240
    %415 = vmatpush1.bf16.msra.mxu0 %v239
    %416 = vmatprep.subr.bf16.mxu0 %v244
    %417 = vmatpush1.bf16.msra.mxu0 %v243
    %418 = vmatprep.subr.bf16.mxu0 %v248
    %419 = vmatpush1.bf16.msra.mxu0 %v247
    %420 = vmatprep.subr.bf16.mxu0 %v252
    %421 = vmatpush1.bf16.msra.mxu0 %v251
    %422 = vmatprep.subr.bf16.mxu0 %v256
    %423 = vmatpush1.bf16.msra.mxu0 %v255
    %424 = vmatprep.subr.bf16.mxu0 %v260
    %425 = vmatpush1.bf16.msra.mxu0 %v259
    %426 = vmatprep.subr.bf16.mxu0 %v264
    %427 = vmatpush1.bf16.msra.mxu0 %v263
    %428 = vmatprep.subr.bf16.mxu0 %v268
    %429 = vmatpush1.bf16.msra.mxu0 %v267
    %430 = vmatprep.subr.bf16.mxu0 0
    %431 = vmatpush1.bf16.msra.mxu0 0
    %432 = vmatprep.subr.bf16.mxu0 0
    %433 = vmatpush1.bf16.msra.mxu0 0
    %434 = vmatprep.subr.bf16.mxu0 0
    %435 = vmatpush1.bf16.msra.mxu0 0
    %436 = vmatprep.subr.bf16.mxu0 0
    %437 = vmatpush1.bf16.msra.mxu0 0
    %438 = vmatprep.subr.bf16.mxu0 0
    %439 = vmatpush1.bf16.msra.mxu0 0
    %440 = vmatprep.subr.bf16.mxu0 0
    %441 = vmatpush1.bf16.msra.mxu0 0
    %442 = vmatprep.subr.bf16.mxu0 0
    %443 = vmatpush1.bf16.msra.mxu0 0
    %444 = vmatprep.subr.bf16.mxu0 0
    %445 = vmatpush1.bf16.msra.mxu0 0
    %446 = vmatprep.mubr.bf16.mxu0 0
    %447 = vmatmul.mubr.bf16.gmra.mrb[0].mxu0 %v79
    %v448 = vpop.f32.mrb[0].mxu0
    %v449 = vadd.f32 %v132, %v448
    %v450 = vpop.f32.mrb[0].mxu0
    %v451 = vadd.f32 %v136, %v450
    %v452 = vpop.f32.mrb[0].mxu0
    %v453 = vadd.f32 %v132, %v452
    %v454 = vpop.f32.mrb[0].mxu0
    %v455 = vadd.f32 %v136, %v454
    %456 = vmatprep.mubr.bf16.mxu0 0
    %457 = vmatmul.mubr.bf16.gmra.mrb[0].mxu0 %v80
    %v458 = vpop.f32.mrb[0].mxu0
    %v459 = vadd.f32 %v132, %v458
    %v460 = vpop.f32.mrb[0].mxu0
    %v461 = vadd.f32 %v136, %v460
    %v462 = vpop.f32.mrb[0].mxu0
    %v463 = vadd.f32 %v132, %v462
    %v464 = vpop.f32.mrb[0].mxu0
    %v465 = vadd.f32 %v136, %v464
    %466 = vmatprep.mubr.bf16.mxu0 0
    %467 = vmatmul.mubr.bf16.gmra.mrb[0].mxu0 %v81
    %v468 = vpop.f32.mrb[0].mxu0
    %v469 = vadd.f32 %v132, %v468
    %v470 = vpop.f32.mrb[0].mxu0
    %v471 = vadd.f32 %v136, %v470
    %v472 = vpop.f32.mrb[0].mxu0
    %v473 = vadd.f32 %v132, %v472
    %v474 = vpop.f32.mrb[0].mxu0
    %v475 = vadd.f32 %v136, %v474
    %476 = vmatprep.mubr.bf16.mxu0 0
    %477 = vmatmul.mubr.bf16.gmra.mrb[0].mxu0 %v82
    %v478 = vpop.f32.mrb[0].mxu0
    %v479 = vadd.f32 %v132, %v478
    %v480 = vpop.f32.mrb[0].mxu0
    %v481 = vadd.f32 %v136, %v480
    %v482 = vpop.f32.mrb[0].mxu0
    %v483 = vadd.f32 %v132, %v482
    %v484 = vpop.f32.mrb[0].mxu0
    %v485 = vadd.f32 %v136, %v484
    %486 = vmatprep.mubr.bf16.mxu0 0
    %487 = vmatmul.mubr.bf16.gmra.mrb[0].mxu0 %v83
    %v488 = vpop.f32.mrb[0].mxu0
    %v489 = vadd.f32 %v132, %v488
    %v490 = vpop.f32.mrb[0].mxu0
    %v491 = vadd.f32 %v136, %v490
    %v492 = vpop.f32.mrb[0].mxu0
    %v493 = vadd.f32 %v132, %v492
    %v494 = vpop.f32.mrb[0].mxu0
    %v495 = vadd.f32 %v136, %v494
    %496 = vmatprep.mubr.bf16.mxu0 0
    %497 = vmatmul.mubr.bf16.gmra.mrb[0].mxu0 %v84
    %v498 = vpop.f32.mrb[0].mxu0
    %v499 = vadd.f32 %v132, %v498
    %v500 = vpop.f32.mrb[0].mxu0
    %v501 = vadd.f32 %v136, %v500
    %v502 = vpop.f32.mrb[0].mxu0
    %v503 = vadd.f32 %v132, %v502
    %v504 = vpop.f32.mrb[0].mxu0
    %v505 = vadd.f32 %v136, %v504
    %506 = vmatprep.mubr.bf16.mxu0 0
    %507 = vmatmul.mubr.bf16.gmra.mrb[0].mxu0 %v85
    %v508 = vpop.f32.mrb[0].mxu0
    %v509 = vadd.f32 %v132, %v508
    %v510 = vpop.f32.mrb[0].mxu0
    %v511 = vadd.f32 %v136, %v510
    %v512 = vpop.f32.mrb[0].mxu0
    %v513 = vadd.f32 %v132, %v512
    %v514 = vpop.f32.mrb[0].mxu0
    %v515 = vadd.f32 %v136, %v514
    %516 = vmatprep.mubr.bf16.mxu0 0
    %517 = vmatmul.mubr.bf16.gmra.mrb[0].mxu0 %v86
    %v518 = vpop.f32.mrb[0].mxu0
    %v519 = vadd.f32 %v132, %v518
    %v520 = vpop.f32.mrb[0].mxu0
    %v521 = vadd.f32 %v136, %v520
    %v522 = vpop.f32.mrb[0].mxu0
    %v523 = vadd.f32 %v132, %v522
    %v524 = vpop.f32.mrb[0].mxu0
    %v525 = vadd.f32 %v136, %v524
    %526 = vdwg.mxu0
    %v527 = vmul.f32 %v336, %v336
    %v528 = vmul.f32 %v338, %v338
    %v529 = vmul.f32 %v449, %v449
    %v530 = vmul.f32 %v451, %v451
    %v531 = vmul.f32 %v340, %v340
    %v532 = vmul.f32 %v342, %v342
    %v533 = vmul.f32 %v453, %v453
    %v534 = vmul.f32 %v455, %v455
    %v535 = vmul.f32 %v346, %v346
    %v536 = vmul.f32 %v348, %v348
    %v537 = vmul.f32 %v459, %v459
    %v538 = vmul.f32 %v461, %v461
    %v539 = vmul.f32 %v350, %v350
    %v540 = vmul.f32 %v352, %v352
    %v541 = vmul.f32 %v463, %v463
    %v542 = vmul.f32 %v465, %v465
    %v543 = vmul.f32 %v356, %v356
    %v544 = vmul.f32 %v358, %v358
    %v545 = vmul.f32 %v469, %v469
    %v546 = vmul.f32 %v471, %v471
    %v547 = vmul.f32 %v360, %v360
    %v548 = vmul.f32 %v362, %v362
    %v549 = vmul.f32 %v473, %v473
    %v550 = vmul.f32 %v475, %v475
    %v551 = vmul.f32 %v366, %v366
    %v552 = vmul.f32 %v368, %v368
    %v553 = vmul.f32 %v479, %v479
    %v554 = vmul.f32 %v481, %v481
    %v555 = vmul.f32 %v370, %v370
    %v556 = vmul.f32 %v372, %v372
    %v557 = vmul.f32 %v483, %v483
    %v558 = vmul.f32 %v485, %v485
    %v559 = vmul.f32 %v376, %v376
    %v560 = vmul.f32 %v378, %v378
    %v561 = vmul.f32 %v489, %v489
    %v562 = vmul.f32 %v491, %v491
    %v563 = vmul.f32 %v380, %v380
    %v564 = vmul.f32 %v382, %v382
    %v565 = vmul.f32 %v493, %v493
    %v566 = vmul.f32 %v495, %v495
    %v567 = vmul.f32 %v386, %v386
    %v568 = vmul.f32 %v388, %v388
    %v569 = vmul.f32 %v499, %v499
    %v570 = vmul.f32 %v501, %v501
    %v571 = vmul.f32 %v390, %v390
    %v572 = vmul.f32 %v392, %v392
    %v573 = vmul.f32 %v503, %v503
    %v574 = vmul.f32 %v505, %v505
    %v575 = vmul.f32 %v396, %v396
    %v576 = vmul.f32 %v398, %v398
    %v577 = vmul.f32 %v509, %v509
    %v578 = vmul.f32 %v511, %v511
    %v579 = vmul.f32 %v400, %v400
    %v580 = vmul.f32 %v402, %v402
    %v581 = vmul.f32 %v513, %v513
    %v582 = vmul.f32 %v515, %v515
    %v583 = vmul.f32 %v406, %v406
    %v584 = vmul.f32 %v408, %v408
    %v585 = vmul.f32 %v519, %v519
    %v586 = vmul.f32 %v521, %v521
    %v587 = vmul.f32 %v410, %v410
    %v588 = vmul.f32 %v412, %v412
    %v589 = vmul.f32 %v523, %v523
    %v590 = vmul.f32 %v525, %v525
    %v591 = vmul.f32 %v336, %v527
    %v592 = vmul.f32 %v338, %v528
    %v593 = vmul.f32 %v449, %v529
    %v594 = vmul.f32 %v451, %v530
    %v595 = vmul.f32 %v340, %v531
    %v596 = vmul.f32 %v342, %v532
    %v597 = vmul.f32 %v453, %v533
    %v598 = vmul.f32 %v455, %v534
    %v599 = vmul.f32 %v346, %v535
    %v600 = vmul.f32 %v348, %v536
    %v601 = vmul.f32 %v459, %v537
    %v602 = vmul.f32 %v461, %v538
    %v603 = vmul.f32 %v350, %v539
    %v604 = vmul.f32 %v352, %v540
    %v605 = vmul.f32 %v463, %v541
    %v606 = vmul.f32 %v465, %v542
    %v607 = vmul.f32 %v356, %v543
    %v608 = vmul.f32 %v358, %v544
    %v609 = vmul.f32 %v469, %v545
    %v610 = vmul.f32 %v471, %v546
    %v611 = vmul.f32 %v360, %v547
    %v612 = vmul.f32 %v362, %v548
    %v613 = vmul.f32 %v473, %v549
    %v614 = vmul.f32 %v475, %v550
    %v615 = vmul.f32 %v366, %v551
    %v616 = vmul.f32 %v368, %v552
    %v617 = vmul.f32 %v479, %v553
    %v618 = vmul.f32 %v481, %v554
    %v619 = vmul.f32 %v370, %v555
    %v620 = vmul.f32 %v372, %v556
    %v621 = vmul.f32 %v483, %v557
    %v622 = vmul.f32 %v485, %v558
    %v623 = vmul.f32 %v376, %v559
    %v624 = vmul.f32 %v378, %v560
    %v625 = vmul.f32 %v489, %v561
    %v626 = vmul.f32 %v491, %v562
    %v627 = vmul.f32 %v380, %v563
    %v628 = vmul.f32 %v382, %v564
    %v629 = vmul.f32 %v493, %v565
    %v630 = vmul.f32 %v495, %v566
    %v631 = vmul.f32 %v386, %v567
    %v632 = vmul.f32 %v388, %v568
    %v633 = vmul.f32 %v499, %v569
    %v634 = vmul.f32 %v501, %v570
    %v635 = vmul.f32 %v390, %v571
    %v636 = vmul.f32 %v392, %v572
    %v637 = vmul.f32 %v503, %v573
    %v638 = vmul.f32 %v505, %v574
    %v639 = vmul.f32 %v396, %v575
    %v640 = vmul.f32 %v398, %v576
    %v641 = vmul.f32 %v509, %v577
    %v642 = vmul.f32 %v511, %v578
    %v643 = vmul.f32 %v400, %v579
    %v644 = vmul.f32 %v402, %v580
    %v645 = vmul.f32 %v513, %v581
    %v646 = vmul.f32 %v515, %v582
    %v647 = vmul.f32 %v406, %v583
    %v648 = vmul.f32 %v408, %v584
    %v649 = vmul.f32 %v519, %v585
    %v650 = vmul.f32 %v521, %v586
    %v651 = vmul.f32 %v410, %v587
    %v652 = vmul.f32 %v412, %v588
    %v653 = vmul.f32 %v523, %v589
    %v654 = vmul.f32 %v525, %v590
    %v655 = vmul.f32 %v591, 0.044715
    %v656 = vmul.f32 %v592, 0.044715
    %v657 = vmul.f32 %v593, 0.044715
    %v658 = vmul.f32 %v594, 0.044715
    %v659 = vmul.f32 %v595, 0.044715
    %v660 = vmul.f32 %v596, 0.044715
    %v661 = vmul.f32 %v597, 0.044715
    %v662 = vmul.f32 %v598, 0.044715
    %v663 = vmul.f32 %v599, 0.044715
    %v664 = vmul.f32 %v600, 0.044715
    %v665 = vmul.f32 %v601, 0.044715
    %v666 = vmul.f32 %v602, 0.044715
    %v667 = vmul.f32 %v603, 0.044715
    %v668 = vmul.f32 %v604, 0.044715
    %v669 = vmul.f32 %v605, 0.044715
    %v670 = vmul.f32 %v606, 0.044715
    %v671 = vmul.f32 %v607, 0.044715
    %v672 = vmul.f32 %v608, 0.044715
    %v673 = vmul.f32 %v609, 0.044715
    %v674 = vmul.f32 %v610, 0.044715
    %v675 = vmul.f32 %v611, 0.044715
    %v676 = vmul.f32 %v612, 0.044715
    %v677 = vmul.f32 %v613, 0.044715
    %v678 = vmul.f32 %v614, 0.044715
    %v679 = vmul.f32 %v615, 0.044715
    %v680 = vmul.f32 %v616, 0.044715
    %v681 = vmul.f32 %v617, 0.044715
    %v682 = vmul.f32 %v618, 0.044715
    %v683 = vmul.f32 %v619, 0.044715
    %v684 = vmul.f32 %v620, 0.044715
    %v685 = vmul.f32 %v621, 0.044715
    %v686 = vmul.f32 %v622, 0.044715
    %v687 = vmul.f32 %v623, 0.044715
    %v688 = vmul.f32 %v624, 0.044715
    %v689 = vmul.f32 %v625, 0.044715
    %v690 = vmul.f32 %v626, 0.044715
    %v691 = vmul.f32 %v627, 0.044715
    %v692 = vmul.f32 %v628, 0.044715
    %v693 = vmul.f32 %v629, 0.044715
    %v694 = vmul.f32 %v630, 0.044715
    %v695 = vmul.f32 %v631, 0.044715
    %v696 = vmul.f32 %v632, 0.044715
    %v697 = vmul.f32 %v633, 0.044715
    %v698 = vmul.f32 %v634, 0.044715
    %v699 = vmul.f32 %v635, 0.044715
    %v700 = vmul.f32 %v636, 0.044715
    %v701 = vmul.f32 %v637, 0.044715
    %v702 = vmul.f32 %v638, 0.044715
    %v703 = vmul.f32 %v639, 0.044715
    %v704 = vmul.f32 %v640, 0.044715
    %v705 = vmul.f32 %v641, 0.044715
    %v706 = vmul.f32 %v642, 0.044715
    %v707 = vmul.f32 %v643, 0.044715
    %v708 = vmul.f32 %v644, 0.044715
    %v709 = vmul.f32 %v645, 0.044715
    %v710 = vmul.f32 %v646, 0.044715
    %v711 = vmul.f32 %v647, 0.044715
    %v712 = vmul.f32 %v648, 0.044715
    %v713 = vmul.f32 %v649, 0.044715
    %v714 = vmul.f32 %v650, 0.044715
    %v715 = vmul.f32 %v651, 0.044715
    %v716 = vmul.f32 %v652, 0.044715
    %v717 = vmul.f32 %v653, 0.044715
    %v718 = vmul.f32 %v654, 0.044715
    %v719 = vadd.f32 %v336, %v655
    %v720 = vadd.f32 %v338, %v656
    %v721 = vadd.f32 %v449, %v657
    %v722 = vadd.f32 %v451, %v658
    %v723 = vadd.f32 %v340, %v659
    %v724 = vadd.f32 %v342, %v660
    %v725 = vadd.f32 %v453, %v661
    %v726 = vadd.f32 %v455, %v662
    %v727 = vadd.f32 %v346, %v663
    %v728 = vadd.f32 %v348, %v664
    %v729 = vadd.f32 %v459, %v665
    %v730 = vadd.f32 %v461, %v666
    %v731 = vadd.f32 %v350, %v667
    %v732 = vadd.f32 %v352, %v668
    %v733 = vadd.f32 %v463, %v669
    %v734 = vadd.f32 %v465, %v670
    %v735 = vadd.f32 %v356, %v671
    %v736 = vadd.f32 %v358, %v672
    %v737 = vadd.f32 %v469, %v673
    %v738 = vadd.f32 %v471, %v674
    %v739 = vadd.f32 %v360, %v675
    %v740 = vadd.f32 %v362, %v676
    %v741 = vadd.f32 %v473, %v677
    %v742 = vadd.f32 %v475, %v678
    %v743 = vadd.f32 %v366, %v679
    %v744 = vadd.f32 %v368, %v680
    %v745 = vadd.f32 %v479, %v681
    %v746 = vadd.f32 %v481, %v682
    %v747 = vadd.f32 %v370, %v683
    %v748 = vadd.f32 %v372, %v684
    %v749 = vadd.f32 %v483, %v685
    %v750 = vadd.f32 %v485, %v686
    %v751 = vadd.f32 %v376, %v687
    %v752 = vadd.f32 %v378, %v688
    %v753 = vadd.f32 %v489, %v689
    %v754 = vadd.f32 %v491, %v690
    %v755 = vadd.f32 %v380, %v691
    %v756 = vadd.f32 %v382, %v692
    %v757 = vadd.f32 %v493, %v693
    %v758 = vadd.f32 %v495, %v694
    %v759 = vadd.f32 %v386, %v695
    %v760 = vadd.f32 %v388, %v696
    %v761 = vadd.f32 %v499, %v697
    %v762 = vadd.f32 %v501, %v698
    %v763 = vadd.f32 %v390, %v699
    %v764 = vadd.f32 %v392, %v700
    %v765 = vadd.f32 %v503, %v701
    %v766 = vadd.f32 %v505, %v702
    %v767 = vadd.f32 %v396, %v703
    %v768 = vadd.f32 %v398, %v704
    %v769 = vadd.f32 %v509, %v705
    %v770 = vadd.f32 %v511, %v706
    %v771 = vadd.f32 %v400, %v707
    %v772 = vadd.f32 %v402, %v708
    %v773 = vadd.f32 %v513, %v709
    %v774 = vadd.f32 %v515, %v710
    %v775 = vadd.f32 %v406, %v711
    %v776 = vadd.f32 %v408, %v712
    %v777 = vadd.f32 %v519, %v713
    %v778 = vadd.f32 %v521, %v714
    %v779 = vadd.f32 %v410, %v715
    %v780 = vadd.f32 %v412, %v716
    %v781 = vadd.f32 %v523, %v717
    %v782 = vadd.f32 %v525, %v718
    %v783 = vmul.f32 %v719, 0.7978846
    %v784 = vmul.f32 %v720, 0.7978846
    %v785 = vmul.f32 %v721, 0.7978846
    %v786 = vmul.f32 %v722, 0.7978846
    %v787 = vmul.f32 %v723, 0.7978846
    %v788 = vmul.f32 %v724, 0.7978846
    %v789 = vmul.f32 %v725, 0.7978846
    %v790 = vmul.f32 %v726, 0.7978846
    %v791 = vmul.f32 %v727, 0.7978846
    %v792 = vmul.f32 %v728, 0.7978846
    %v793 = vmul.f32 %v729, 0.7978846
    %v794 = vmul.f32 %v730, 0.7978846
    %v795 = vmul.f32 %v731, 0.7978846
    %v796 = vmul.f32 %v732, 0.7978846
    %v797 = vmul.f32 %v733, 0.7978846
    %v798 = vmul.f32 %v734, 0.7978846
    %v799 = vmul.f32 %v735, 0.7978846
    %v800 = vmul.f32 %v736, 0.7978846
    %v801 = vmul.f32 %v737, 0.7978846
    %v802 = vmul.f32 %v738, 0.7978846
    %v803 = vmul.f32 %v739, 0.7978846
    %v804 = vmul.f32 %v740, 0.7978846
    %v805 = vmul.f32 %v741, 0.7978846
    %v806 = vmul.f32 %v742, 0.7978846
    %v807 = vmul.f32 %v743, 0.7978846
    %v808 = vmul.f32 %v744, 0.7978846
    %v809 = vmul.f32 %v745, 0.7978846
    %v810 = vmul.f32 %v746, 0.7978846
    %v811 = vmul.f32 %v747, 0.7978846
    %v812 = vmul.f32 %v748, 0.7978846
    %v813 = vmul.f32 %v749, 0.7978846
    %v814 = vmul.f32 %v750, 0.7978846
    %v815 = vmul.f32 %v751, 0.7978846
    %v816 = vmul.f32 %v752, 0.7978846
    %v817 = vmul.f32 %v753, 0.7978846
    %v818 = vmul.f32 %v754, 0.7978846
    %v819 = vmul.f32 %v755, 0.7978846
    %v820 = vmul.f32 %v756, 0.7978846
    %v821 = vmul.f32 %v757, 0.7978846
    %v822 = vmul.f32 %v758, 0.7978846
    %v823 = vmul.f32 %v759, 0.7978846
    %v824 = vmul.f32 %v760, 0.7978846
    %v825 = vmul.f32 %v761, 0.7978846
    %v826 = vmul.f32 %v762, 0.7978846
    %v827 = vmul.f32 %v763, 0.7978846
    %v828 = vmul.f32 %v764, 0.7978846
    %v829 = vmul.f32 %v765, 0.7978846
    %v830 = vmul.f32 %v766, 0.7978846
    %v831 = vmul.f32 %v767, 0.7978846
    %v832 = vmul.f32 %v768, 0.7978846
    %v833 = vmul.f32 %v769, 0.7978846
    %v834 = vmul.f32 %v770, 0.7978846
    %v835 = vmul.f32 %v771, 0.7978846
    %v836 = vmul.f32 %v772, 0.7978846
    %v837 = vmul.f32 %v773, 0.7978846
    %v838 = vmul.f32 %v774, 0.7978846
    %v839 = vmul.f32 %v775, 0.7978846
    %v840 = vmul.f32 %v776, 0.7978846
    %v841 = vmul.f32 %v777, 0.7978846
    %v842 = vmul.f32 %v778, 0.7978846
    %v843 = vmul.f32 %v779, 0.7978846
    %v844 = vmul.f32 %v780, 0.7978846
    %v845 = vmul.f32 %v781, 0.7978846
    %v846 = vmul.f32 %v782, 0.7978846
    %v847 = vtanh.pop %v783
    %v848 = vtanh.pop %v784
    %v849 = vtanh.pop %v785
    %v850 = vtanh.pop %v786
    %v851 = vtanh.pop %v787
    %v852 = vtanh.pop %v788
    %v853 = vtanh.pop %v789
    %v854 = vtanh.pop %v790
    %v855 = vtanh.pop %v791
    %v856 = vtanh.pop %v792
    %v857 = vtanh.pop %v793
    %v858 = vtanh.pop %v794
    %v859 = vtanh.pop %v795
    %v860 = vtanh.pop %v796
    %v861 = vtanh.pop %v797
    %v862 = vtanh.pop %v798
    %v863 = vtanh.pop %v799
    %v864 = vtanh.pop %v800
    %v865 = vtanh.pop %v801
    %v866 = vtanh.pop %v802
    %v867 = vtanh.pop %v803
    %v868 = vtanh.pop %v804
    %v869 = vtanh.pop %v805
    %v870 = vtanh.pop %v806
    %v871 = vtanh.pop %v807
    %v872 = vtanh.pop %v808
    %v873 = vtanh.pop %v809
    %v874 = vtanh.pop %v810
    %v875 = vtanh.pop %v811
    %v876 = vtanh.pop %v812
    %v877 = vtanh.pop %v813
    %v878 = vtanh.pop %v814
    %v879 = vtanh.pop %v815
    %v880 = vtanh.pop %v816
    %v881 = vtanh.pop %v817
    %v882 = vtanh.pop %v818
    %v883 = vtanh.pop %v819
    %v884 = vtanh.pop %v820
    %v885 = vtanh.pop %v821
    %v886 = vtanh.pop %v822
    %v887 = vtanh.pop %v823
    %v888 = vtanh.pop %v824
    %v889 = vtanh.pop %v825
    %v890 = vtanh.pop %v826
    %v891 = vtanh.pop %v827
    %v892 = vtanh.pop %v828
    %v893 = vtanh.pop %v829
    %v894 = vtanh.pop %v830
    %v895 = vtanh.pop %v831
    %v896 = vtanh.pop %v832
    %v897 = vtanh.pop %v833
    %v898 = vtanh.pop %v834
    %v899 = vtanh.pop %v835
    %v900 = vtanh.pop %v836
    %v901 = vtanh.pop %v837
    %v902 = vtanh.pop %v838
    %v903 = vtanh.pop %v839
    %v904 = vtanh.pop %v840
    %v905 = vtanh.pop %v841
    %v906 = vtanh.pop %v842
    %v907 = vtanh.pop %v843
    %v908 = vtanh.pop %v844
    %v909 = vtanh.pop %v845
    %v910 = vtanh.pop %v846
    %v911 = vadd.f32 %v847, 1.0
    %v912 = vadd.f32 %v848, 1.0
    %v913 = vadd.f32 %v849, 1.0
    %v914 = vadd.f32 %v850, 1.0
    %v915 = vadd.f32 %v851, 1.0
    %v916 = vadd.f32 %v852, 1.0
    %v917 = vadd.f32 %v853, 1.0
    %v918 = vadd.f32 %v854, 1.0
    %v919 = vadd.f32 %v855, 1.0
    %v920 = vadd.f32 %v856, 1.0
    %v921 = vadd.f32 %v857, 1.0
    %v922 = vadd.f32 %v858, 1.0
    %v923 = vadd.f32 %v859, 1.0
    %v924 = vadd.f32 %v860, 1.0
    %v925 = vadd.f32 %v861, 1.0
    %v926 = vadd.f32 %v862, 1.0
    %v927 = vadd.f32 %v863, 1.0
    %v928 = vadd.f32 %v864, 1.0
    %v929 = vadd.f32 %v865, 1.0
    %v930 = vadd.f32 %v866, 1.0
    %v931 = vadd.f32 %v867, 1.0
    %v932 = vadd.f32 %v868, 1.0
    %v933 = vadd.f32 %v869, 1.0
    %v934 = vadd.f32 %v870, 1.0
    %v935 = vadd.f32 %v871, 1.0
    %v936 = vadd.f32 %v872, 1.0
    %v937 = vadd.f32 %v873, 1.0
    %v938 = vadd.f32 %v874, 1.0
    %v939 = vadd.f32 %v875, 1.0
    %v940 = vadd.f32 %v876, 1.0
    %v941 = vadd.f32 %v877, 1.0
    %v942 = vadd.f32 %v878, 1.0
    %v943 = vadd.f32 %v879, 1.0
    %v944 = vadd.f32 %v880, 1.0
    %v945 = vadd.f32 %v881, 1.0
    %v946 = vadd.f32 %v882, 1.0
    %v947 = vadd.f32 %v883, 1.0
    %v948 = vadd.f32 %v884, 1.0
    %v949 = vadd.f32 %v885, 1.0
    %v950 = vadd.f32 %v886, 1.0
    %v951 = vadd.f32 %v887, 1.0
    %v952 = vadd.f32 %v888, 1.0
    %v953 = vadd.f32 %v889, 1.0
    %v954 = vadd.f32 %v890, 1.0
    %v955 = vadd.f32 %v891, 1.0
    %v956 = vadd.f32 %v892, 1.0
    %v957 = vadd.f32 %v893, 1.0
    %v958 = vadd.f32 %v894, 1.0
    %v959 = vadd.f32 %v895, 1.0
    %v960 = vadd.f32 %v896, 1.0
    %v961 = vadd.f32 %v897, 1.0
    %v962 = vadd.f32 %v898, 1.0
    %v963 = vadd.f32 %v899, 1.0
    %v964 = vadd.f32 %v900, 1.0
    %v965 = vadd.f32 %v901, 1.0
    %v966 = vadd.f32 %v902, 1.0
    %v967 = vadd.f32 %v903, 1.0
    %v968 = vadd.f32 %v904, 1.0
    %v969 = vadd.f32 %v905, 1.0
    %v970 = vadd.f32 %v906, 1.0
    %v971 = vadd.f32 %v907, 1.0
    %v972 = vadd.f32 %v908, 1.0
    %v973 = vadd.f32 %v909, 1.0
    %v974 = vadd.f32 %v910, 1.0
    %v975 = vmul.f32 %v911, 0.5
    %v976 = vmul.f32 %v912, 0.5
    %v977 = vmul.f32 %v913, 0.5
    %v978 = vmul.f32 %v914, 0.5
    %v979 = vmul.f32 %v915, 0.5
    %v980 = vmul.f32 %v916, 0.5
    %v981 = vmul.f32 %v917, 0.5
    %v982 = vmul.f32 %v918, 0.5
    %v983 = vmul.f32 %v919, 0.5
    %v984 = vmul.f32 %v920, 0.5
    %v985 = vmul.f32 %v921, 0.5
    %v986 = vmul.f32 %v922, 0.5
    %v987 = vmul.f32 %v923, 0.5
    %v988 = vmul.f32 %v924, 0.5
    %v989 = vmul.f32 %v925, 0.5
    %v990 = vmul.f32 %v926, 0.5
    %v991 = vmul.f32 %v927, 0.5
    %v992 = vmul.f32 %v928, 0.5
    %v993 = vmul.f32 %v929, 0.5
    %v994 = vmul.f32 %v930, 0.5
    %v995 = vmul.f32 %v931, 0.5
    %v996 = vmul.f32 %v932, 0.5
    %v997 = vmul.f32 %v933, 0.5
    %v998 = vmul.f32 %v934, 0.5
    %v999 = vmul.f32 %v935, 0.5
    %v1000 = vmul.f32 %v936, 0.5
    %v1001 = vmul.f32 %v937, 0.5
    %v1002 = vmul.f32 %v938, 0.5
    %v1003 = vmul.f32 %v939, 0.5
    %v1004 = vmul.f32 %v940, 0.5
    %v1005 = vmul.f32 %v941, 0.5
    %v1006 = vmul.f32 %v942, 0.5
    %v1007 = vmul.f32 %v943, 0.5
    %v1008 = vmul.f32 %v944, 0.5
    %v1009 = vmul.f32 %v945, 0.5
    %v1010 = vmul.f32 %v946, 0.5
    %v1011 = vmul.f32 %v947, 0.5
    %v1012 = vmul.f32 %v948, 0.5
    %v1013 = vmul.f32 %v949, 0.5
    %v1014 = vmul.f32 %v950, 0.5
    %v1015 = vmul.f32 %v951, 0.5
    %v1016 = vmul.f32 %v952, 0.5
    %v1017 = vmul.f32 %v953, 0.5
    %v1018 = vmul.f32 %v954, 0.5
    %v1019 = vmul.f32 %v955, 0.5
    %v1020 = vmul.f32 %v956, 0.5
    %v1021 = vmul.f32 %v957, 0.5
    %v1022 = vmul.f32 %v958, 0.5
    %v1023 = vmul.f32 %v959, 0.5
    %v1024 = vmul.f32 %v960, 0.5
    %v1025 = vmul.f32 %v961, 0.5
    %v1026 = vmul.f32 %v962, 0.5
    %v1027 = vmul.f32 %v963, 0.5
    %v1028 = vmul.f32 %v964, 0.5
    %v1029 = vmul.f32 %v965, 0.5
    %v1030 = vmul.f32 %v966, 0.5
    %v1031 = vmul.f32 %v967, 0.5
    %v1032 = vmul.f32 %v968, 0.5
    %v1033 = vmul.f32 %v969, 0.5
    %v1034 = vmul.f32 %v970, 0.5
    %v1035 = vmul.f32 %v971, 0.5
    %v1036 = vmul.f32 %v972, 0.5
    %v1037 = vmul.f32 %v973, 0.5
    %v1038 = vmul.f32 %v974, 0.5
    %v1039 = vmul.f32 %v336, %v975
    %v1040 = vmul.f32 %v338, %v976
    %v1041 = vmul.f32 %v449, %v977
    %v1042 = vmul.f32 %v451, %v978
    %v1043 = vmul.f32 %v340, %v979
    %v1044 = vmul.f32 %v342, %v980
    %v1045 = vmul.f32 %v453, %v981
    %v1046 = vmul.f32 %v455, %v982
    %v1047 = vmul.f32 %v346, %v983
    %v1048 = vmul.f32 %v348, %v984
    %v1049 = vmul.f32 %v459, %v985
    %v1050 = vmul.f32 %v461, %v986
    %v1051 = vmul.f32 %v350, %v987
    %v1052 = vmul.f32 %v352, %v988
    %v1053 = vmul.f32 %v463, %v989
    %v1054 = vmul.f32 %v465, %v990
    %v1055 = vmul.f32 %v356, %v991
    %v1056 = vmul.f32 %v358, %v992
    %v1057 = vmul.f32 %v469, %v993
    %v1058 = vmul.f32 %v471, %v994
    %v1059 = vmul.f32 %v360, %v995
    %v1060 = vmul.f32 %v362, %v996
    %v1061 = vmul.f32 %v473, %v997
    %v1062 = vmul.f32 %v475, %v998
    %v1063 = vmul.f32 %v366, %v999
    %v1064 = vmul.f32 %v368, %v1000
    %v1065 = vmul.f32 %v479, %v1001
    %v1066 = vmul.f32 %v481, %v1002
    %v1067 = vmul.f32 %v370, %v1003
    %v1068 = vmul.f32 %v372, %v1004
    %v1069 = vmul.f32 %v483, %v1005
    %v1070 = vmul.f32 %v485, %v1006
    %v1071 = vmul.f32 %v376, %v1007
    %v1072 = vmul.f32 %v378, %v1008
    %v1073 = vmul.f32 %v489, %v1009
    %v1074 = vmul.f32 %v491, %v1010
    %v1075 = vmul.f32 %v380, %v1011
    %v1076 = vmul.f32 %v382, %v1012
    %v1077 = vmul.f32 %v493, %v1013
    %v1078 = vmul.f32 %v495, %v1014
    %v1079 = vmul.f32 %v386, %v1015
    %v1080 = vmul.f32 %v388, %v1016
    %v1081 = vmul.f32 %v499, %v1017
    %v1082 = vmul.f32 %v501, %v1018
    %v1083 = vmul.f32 %v390, %v1019
    %v1084 = vmul.f32 %v392, %v1020
    %v1085 = vmul.f32 %v503, %v1021
    %v1086 = vmul.f32 %v505, %v1022
    %v1087 = vmul.f32 %v396, %v1023
    %v1088 = vmul.f32 %v398, %v1024
    %v1089 = vmul.f32 %v509, %v1025
    %v1090 = vmul.f32 %v511, %v1026
    %v1091 = vmul.f32 %v400, %v1027
    %v1092 = vmul.f32 %v402, %v1028
    %v1093 = vmul.f32 %v513, %v1029
    %v1094 = vmul.f32 %v515, %v1030
    %v1095 = vmul.f32 %v406, %v1031
    %v1096 = vmul.f32 %v408, %v1032
    %v1097 = vmul.f32 %v519, %v1033
    %v1098 = vmul.f32 %v521, %v1034
    %v1099 = vmul.f32 %v410, %v1035
    %v1100 = vmul.f32 %v412, %v1036
    %v1101 = vmul.f32 %v523, %v1037
    %v1102 = vmul.f32 %v525, %v1038
    %v1103 = vpack.c.bf16 %v1043, %v1039
    %v1104 = vpack.c.bf16 %v1044, %v1040
    %v1105 = vpack.c.bf16 %v1045, %v1041
    %v1106 = vpack.c.bf16 %v1046, %v1042
    %v1107 = vpack.c.bf16 %v1051, %v1047
    %v1108 = vpack.c.bf16 %v1052, %v1048
    %v1109 = vpack.c.bf16 %v1053, %v1049
    %v1110 = vpack.c.bf16 %v1054, %v1050
    %v1111 = vpack.c.bf16 %v1059, %v1055
    %v1112 = vpack.c.bf16 %v1060, %v1056
    %v1113 = vpack.c.bf16 %v1061, %v1057
    %v1114 = vpack.c.bf16 %v1062, %v1058
    %v1115 = vpack.c.bf16 %v1067, %v1063
    %v1116 = vpack.c.bf16 %v1068, %v1064
    %v1117 = vpack.c.bf16 %v1069, %v1065
    %v1118 = vpack.c.bf16 %v1070, %v1066
    %v1119 = vpack.c.bf16 %v1075, %v1071
    %v1120 = vpack.c.bf16 %v1076, %v1072
    %v1121 = vpack.c.bf16 %v1077, %v1073
    %v1122 = vpack.c.bf16 %v1078, %v1074
    %v1123 = vpack.c.bf16 %v1083, %v1079
    %v1124 = vpack.c.bf16 %v1084, %v1080
    %v1125 = vpack.c.bf16 %v1085, %v1081
    %v1126 = vpack.c.bf16 %v1086, %v1082
    %v1127 = vpack.c.bf16 %v1091, %v1087
    %v1128 = vpack.c.bf16 %v1092, %v1088
    %v1129 = vpack.c.bf16 %v1093, %v1089
    %v1130 = vpack.c.bf16 %v1094, %v1090
    %v1131 = vpack.c.bf16 %v1099, %v1095
    %v1132 = vpack.c.bf16 %v1100, %v1096
    %v1133 = vpack.c.bf16 %v1101, %v1097
    %v1134 = vpack.c.bf16 %v1102, %v1098
    %v1135 = vld [vmem:[#allocation7] sm:$0xf]
    %v1136 = vld [vmem:[#allocation7 + $0x4] sm:$0xf]
    %v1137 = vld [vmem:[#allocation7 + $0x8] sm:$0xf]
    %v1138 = vld [vmem:[#allocation7 + $0xc] sm:$0xf]
    %v1139 = vld [vmem:[#allocation7 + $0x10] sm:$0xf]
    %v1140 = vld [vmem:[#allocation7 + $0x14] sm:$0xf]
    %v1141 = vld [vmem:[#allocation7 + $0x18] sm:$0xf]
    %v1142 = vld [vmem:[#allocation7 + $0x1c] sm:$0xf]
    %v1143 = vld [vmem:[#allocation7 + $0x20] sm:$0xf]
    %v1144 = vld [vmem:[#allocation7 + $0x24] sm:$0xf]
    %v1145 = vld [vmem:[#allocation7 + $0x28] sm:$0xf]
    %v1146 = vld [vmem:[#allocation7 + $0x2c] sm:$0xf]
    %v1147 = vld [vmem:[#allocation7 + $0x30] sm:$0xf]
    %v1148 = vld [vmem:[#allocation7 + $0x34] sm:$0xf]
    %v1149 = vld [vmem:[#allocation7 + $0x38] sm:$0xf]
    %v1150 = vld [vmem:[#allocation7 + $0x3c] sm:$0xf]
    %v1151 = vld [vmem:[#allocation7 + $0x40] sm:$0xf]
    %v1152 = vld [vmem:[#allocation7 + $0x44] sm:$0xf]
    %v1153 = vld [vmem:[#allocation7 + $0x48] sm:$0xf]
    %v1154 = vld [vmem:[#allocation7 + $0x4c] sm:$0xf]
    %v1155 = vld [vmem:[#allocation7 + $0x50] sm:$0xf]
    %v1156 = vld [vmem:[#allocation7 + $0x54] sm:$0xf]
    %v1157 = vld [vmem:[#allocation7 + $0x58] sm:$0xf]
    %v1158 = vld [vmem:[#allocation7 + $0x5c] sm:$0xf]
    %v1159 = vld [vmem:[#allocation7 + $0x60] sm:$0xf]
    %v1160 = vld [vmem:[#allocation7 + $0x64] sm:$0xf]
    %v1161 = vld [vmem:[#allocation7 + $0x68] sm:$0xf]
    %v1162 = vld [vmem:[#allocation7 + $0x6c] sm:$0xf]
    %v1163 = vld [vmem:[#allocation7 + $0x70] sm:$0xf]
    %v1164 = vld [vmem:[#allocation7 + $0x74] sm:$0xf]
    %v1165 = vld [vmem:[#allocation7 + $0x78] sm:$0xf]
    %v1166 = vld [vmem:[#allocation7 + $0x7c] sm:$0xf]
    %v1167 = vld [vmem:[#allocation7 + $0x80] sm:$0xf]
    %v1168 = vld [vmem:[#allocation7 + $0x84] sm:$0xf]
    %v1169 = vld [vmem:[#allocation7 + $0x88] sm:$0xf]
    %v1170 = vld [vmem:[#allocation7 + $0x8c] sm:$0xf]
    %v1171 = vld [vmem:[#allocation7 + $0x90] sm:$0xf]
    %v1172 = vld [vmem:[#allocation7 + $0x94] sm:$0xf]
    %v1173 = vld [vmem:[#allocation7 + $0x98] sm:$0xf]
    %v1174 = vld [vmem:[#allocation7 + $0x9c] sm:$0xf]
    %v1175 = vld [vmem:[#allocation7 + $0xa0] sm:$0xf]
    %v1176 = vld [vmem:[#allocation7 + $0xa4] sm:$0xf]
    %v1177 = vld [vmem:[#allocation7 + $0xa8] sm:$0xf]
    %v1178 = vld [vmem:[#allocation7 + $0xac] sm:$0xf]
    %v1179 = vld [vmem:[#allocation7 + $0xb0] sm:$0xf]
    %v1180 = vld [vmem:[#allocation7 + $0xb4] sm:$0xf]
    %v1181 = vld [vmem:[#allocation7 + $0xb8] sm:$0xf]
    %v1182 = vld [vmem:[#allocation7 + $0xbc] sm:$0xf]
    %v1183 = vld [vmem:[#allocation7 + $0xc0] sm:$0xf]
    %v1184 = vld [vmem:[#allocation7 + $0xc4] sm:$0xf]
    %v1185 = vld [vmem:[#allocation7 + $0xc8] sm:$0xf]
    %v1186 = vld [vmem:[#allocation7 + $0xcc] sm:$0xf]
    %v1187 = vld [vmem:[#allocation7 + $0xd0] sm:$0xf]
    %v1188 = vld [vmem:[#allocation7 + $0xd4] sm:$0xf]
    %v1189 = vld [vmem:[#allocation7 + $0xd8] sm:$0xf]
    %v1190 = vld [vmem:[#allocation7 + $0xdc] sm:$0xf]
    %v1191 = vld [vmem:[#allocation7 + $0xe0] sm:$0xf]
    %v1192 = vld [vmem:[#allocation7 + $0xe4] sm:$0xf]
    %v1193 = vld [vmem:[#allocation7 + $0xe8] sm:$0xf]
    %v1194 = vld [vmem:[#allocation7 + $0xec] sm:$0xf]
    %v1195 = vld [vmem:[#allocation7 + $0xf0] sm:$0xf]
    %v1196 = vld [vmem:[#allocation7 + $0xf4] sm:$0xf]
    %v1197 = vld [vmem:[#allocation7 + $0xf8] sm:$0xf]
    %v1198 = vld [vmem:[#allocation7 + $0xfc] sm:$0xf]
    %v1199 = vld [vmem:[%s4] sm:$0x1]
    %v1201 = vlaneseq
    %v1202 = vshrl.u32 %v1201, 7
    %v1203 = vsub.s32 0, %v1202
    %v1204 = vrot.slane %v1199, %v1203
    %v1270 = vunpack.c.l.b16 %v1135
    %v1271 = vunpack.c.l.b16 %v1136
    %v1272 = vunpack.c.l.b16 %v1137
    %v1273 = vunpack.c.l.b16 %v1138
    %v1274 = vunpack.c.l.b16 %v1139
    %v1275 = vunpack.c.l.b16 %v1140
    %v1276 = vunpack.c.l.b16 %v1141
    %v1277 = vunpack.c.l.b16 %v1142
    %v1278 = vunpack.c.l.b16 %v1143
    %v1279 = vunpack.c.l.b16 %v1144
    %v1280 = vunpack.c.l.b16 %v1145
    %v1281 = vunpack.c.l.b16 %v1146
    %v1282 = vunpack.c.l.b16 %v1147
    %v1283 = vunpack.c.l.b16 %v1148
    %v1284 = vunpack.c.l.b16 %v1149
    %v1285 = vunpack.c.l.b16 %v1150
    %v1286 = vunpack.c.l.b16 %v1151
    %v1287 = vunpack.c.l.b16 %v1152
    %v1288 = vunpack.c.l.b16 %v1153
    %v1289 = vunpack.c.l.b16 %v1154
    %v1290 = vunpack.c.l.b16 %v1155
    %v1291 = vunpack.c.l.b16 %v1156
    %v1292 = vunpack.c.l.b16 %v1157
    %v1293 = vunpack.c.l.b16 %v1158
    %v1294 = vunpack.c.l.b16 %v1159
    %v1295 = vunpack.c.l.b16 %v1160
    %v1296 = vunpack.c.l.b16 %v1161
    %v1297 = vunpack.c.l.b16 %v1162
    %v1298 = vunpack.c.l.b16 %v1163
    %v1299 = vunpack.c.l.b16 %v1164
    %v1300 = vunpack.c.l.b16 %v1165
    %v1301 = vunpack.c.l.b16 %v1166
    %v1302 = vunpack.c.l.b16 %v1167
    %v1303 = vunpack.c.l.b16 %v1168
    %v1304 = vunpack.c.l.b16 %v1169
    %v1305 = vunpack.c.l.b16 %v1170
    %v1306 = vunpack.c.l.b16 %v1171
    %v1307 = vunpack.c.l.b16 %v1172
    %v1308 = vunpack.c.l.b16 %v1173
    %v1309 = vunpack.c.l.b16 %v1174
    %v1310 = vunpack.c.l.b16 %v1175
    %v1311 = vunpack.c.l.b16 %v1176
    %v1312 = vunpack.c.l.b16 %v1177
    %v1313 = vunpack.c.l.b16 %v1178
    %v1314 = vunpack.c.l.b16 %v1179
    %v1315 = vunpack.c.l.b16 %v1180
    %v1316 = vunpack.c.l.b16 %v1181
    %v1317 = vunpack.c.l.b16 %v1182
    %v1318 = vunpack.c.l.b16 %v1183
    %v1319 = vunpack.c.l.b16 %v1184
    %v1320 = vunpack.c.l.b16 %v1185
    %v1321 = vunpack.c.l.b16 %v1186
    %v1322 = vunpack.c.l.b16 %v1187
    %v1323 = vunpack.c.l.b16 %v1188
    %v1324 = vunpack.c.l.b16 %v1189
    %v1325 = vunpack.c.l.b16 %v1190
    %v1326 = vunpack.c.l.b16 %v1191
    %v1327 = vunpack.c.l.b16 %v1192
    %v1328 = vunpack.c.l.b16 %v1193
    %v1329 = vunpack.c.l.b16 %v1194
    %v1330 = vunpack.c.l.b16 %v1195
    %v1331 = vunpack.c.l.b16 %v1196
    %v1332 = vunpack.c.l.b16 %v1197
    %v1333 = vunpack.c.l.b16 %v1198
    %v1334 = vpack.c.b16 %v1271, %v1270
    %v1335 = vpack.c.b16 %v1273, %v1272
    %v1336 = vpack.c.b16 %v1275, %v1274
    %v1337 = vpack.c.b16 %v1277, %v1276
    %v1338 = vpack.c.b16 %v1279, %v1278
    %v1339 = vpack.c.b16 %v1281, %v1280
    %v1340 = vpack.c.b16 %v1283, %v1282
    %v1341 = vpack.c.b16 %v1285, %v1284
    %v1342 = vpack.c.b16 %v1287, %v1286
    %v1343 = vpack.c.b16 %v1289, %v1288
    %v1344 = vpack.c.b16 %v1291, %v1290
    %v1345 = vpack.c.b16 %v1293, %v1292
    %v1346 = vpack.c.b16 %v1295, %v1294
    %v1347 = vpack.c.b16 %v1297, %v1296
    %v1348 = vpack.c.b16 %v1299, %v1298
    %v1349 = vpack.c.b16 %v1301, %v1300
    %v1350 = vpack.c.b16 %v1303, %v1302
    %v1351 = vpack.c.b16 %v1305, %v1304
    %v1352 = vpack.c.b16 %v1307, %v1306
    %v1353 = vpack.c.b16 %v1309, %v1308
    %v1354 = vpack.c.b16 %v1311, %v1310
    %v1355 = vpack.c.b16 %v1313, %v1312
    %v1356 = vpack.c.b16 %v1315, %v1314
    %v1357 = vpack.c.b16 %v1317, %v1316
    %v1358 = vpack.c.b16 %v1319, %v1318
    %v1359 = vpack.c.b16 %v1321, %v1320
    %v1360 = vpack.c.b16 %v1323, %v1322
    %v1361 = vpack.c.b16 %v1325, %v1324
    %v1362 = vpack.c.b16 %v1327, %v1326
    %v1363 = vpack.c.b16 %v1329, %v1328
    %v1364 = vpack.c.b16 %v1331, %v1330
    %v1365 = vpack.c.b16 %v1333, %v1332
    %1398 = vmatprep.subr.bf16.mxu0 0
    %1399 = vmatpush1.bf16.msra.mxu0 %v1334
    %1400 = vmatprep.subr.bf16.mxu0 0
    %1401 = vmatpush1.bf16.msra.mxu0 %v1335
    %1402 = vmatprep.subr.bf16.mxu0 0
    %1403 = vmatpush1.bf16.msra.mxu0 %v1336
    %1404 = vmatprep.subr.bf16.mxu0 0
    %1405 = vmatpush1.bf16.msra.mxu0 %v1337
    %1406 = vmatprep.subr.bf16.mxu0 0
    %1407 = vmatpush1.bf16.msra.mxu0 %v1338
    %1408 = vmatprep.subr.bf16.mxu0 0
    %1409 = vmatpush1.bf16.msra.mxu0 %v1339
    %1410 = vmatprep.subr.bf16.mxu0 0
    %1411 = vmatpush1.bf16.msra.mxu0 %v1340
    %1412 = vmatprep.subr.bf16.mxu0 0
    %1413 = vmatpush1.bf16.msra.mxu0 %v1341
    %1414 = vmatprep.subr.bf16.mxu0 0
    %1415 = vmatpush1.bf16.msra.mxu0 %v1342
    %1416 = vmatprep.subr.bf16.mxu0 0
    %1417 = vmatpush1.bf16.msra.mxu0 %v1343
    %1418 = vmatprep.subr.bf16.mxu0 0
    %1419 = vmatpush1.bf16.msra.mxu0 %v1344
    %1420 = vmatprep.subr.bf16.mxu0 0
    %1421 = vmatpush1.bf16.msra.mxu0 %v1345
    %1422 = vmatprep.subr.bf16.mxu0 0
    %1423 = vmatpush1.bf16.msra.mxu0 %v1346
    %1424 = vmatprep.subr.bf16.mxu0 0
    %1425 = vmatpush1.bf16.msra.mxu0 %v1347
    %1426 = vmatprep.subr.bf16.mxu0 0
    %1427 = vmatpush1.bf16.msra.mxu0 %v1348
    %1428 = vmatprep.subr.bf16.mxu0 0
    %1429 = vmatpush1.bf16.msra.mxu0 %v1349
    %1430 = vmatprep.mubr.bf16.mxu0 %v1104
    %1431 = vmatmul.mubr.bf16.gmra.mrb[0].mxu0 %v1103
    %v1432 = vpop.f32.mrb[0].mxu0
    %v1433 = vadd.f32 %v1204, %v1432
    %v1434 = vpop.f32.mrb[0].mxu0
    %v1435 = vpop.f32.mrb[0].mxu0
    %v1436 = vadd.f32 %v1204, %v1435
    %v1437 = vpop.f32.mrb[0].mxu0
    %1438 = vmatprep.mubr.bf16.mxu0 %v1108
    %1439 = vmatmul.mubr.bf16.gmra.mrb[0].mxu0 %v1107
    %v1440 = vpop.f32.mrb[0].mxu0
    %v1441 = vadd.f32 %v1204, %v1440
    %v1442 = vpop.f32.mrb[0].mxu0
    %v1443 = vpop.f32.mrb[0].mxu0
    %v1444 = vadd.f32 %v1204, %v1443
    %v1445 = vpop.f32.mrb[0].mxu0
    %1446 = vmatprep.mubr.bf16.mxu0 %v1112
    %1447 = vmatmul.mubr.bf16.gmra.mrb[0].mxu0 %v1111
    %v1448 = vpop.f32.mrb[0].mxu0
    %v1449 = vadd.f32 %v1204, %v1448
    %v1450 = vpop.f32.mrb[0].mxu0
    %v1451 = vpop.f32.mrb[0].mxu0
    %v1452 = vadd.f32 %v1204, %v1451
    %v1453 = vpop.f32.mrb[0].mxu0
    %1454 = vmatprep.mubr.bf16.mxu0 %v1116
    %1455 = vmatmul.mubr.bf16.gmra.mrb[0].mxu0 %v1115
    %v1456 = vpop.f32.mrb[0].mxu0
    %v1457 = vadd.f32 %v1204, %v1456
    %v1458 = vpop.f32.mrb[0].mxu0
    %v1459 = vpop.f32.mrb[0].mxu0
    %v1460 = vadd.f32 %v1204, %v1459
    %v1461 = vpop.f32.mrb[0].mxu0
    %1462 = vmatprep.mubr.bf16.mxu0 %v1120
    %1463 = vmatmul.mubr.bf16.gmra.mrb[0].mxu0 %v1119
    %v1464 = vpop.f32.mrb[0].mxu0
    %v1465 = vadd.f32 %v1204, %v1464
    %v1466 = vpop.f32.mrb[0].mxu0
    %v1467 = vpop.f32.mrb[0].mxu0
    %v1468 = vadd.f32 %v1204, %v1467
    %v1469 = vpop.f32.mrb[0].mxu0
    %1470 = vmatprep.mubr.bf16.mxu0 %v1124
    %1471 = vmatmul.mubr.bf16.gmra.mrb[0].mxu0 %v1123
    %v1472 = vpop.f32.mrb[0].mxu0
    %v1473 = vadd.f32 %v1204, %v1472
    %v1474 = vpop.f32.mrb[0].mxu0
    %v1475 = vpop.f32.mrb[0].mxu0
    %v1476 = vadd.f32 %v1204, %v1475
    %v1477 = vpop.f32.mrb[0].mxu0
    %1478 = vmatprep.mubr.bf16.mxu0 %v1128
    %1479 = vmatmul.mubr.bf16.gmra.mrb[0].mxu0 %v1127
    %v1480 = vpop.f32.mrb[0].mxu0
    %v1481 = vadd.f32 %v1204, %v1480
    %v1482 = vpop.f32.mrb[0].mxu0
    %v1483 = vpop.f32.mrb[0].mxu0
    %v1484 = vadd.f32 %v1204, %v1483
    %v1485 = vpop.f32.mrb[0].mxu0
    %1486 = vmatprep.mubr.bf16.mxu0 %v1132
    %1487 = vmatmul.mubr.bf16.gmra.mrb[0].mxu0 %v1131
    %v1488 = vpop.f32.mrb[0].mxu0
    %v1489 = vadd.f32 %v1204, %v1488
    %v1490 = vpop.f32.mrb[0].mxu0
    %v1491 = vpop.f32.mrb[0].mxu0
    %v1492 = vadd.f32 %v1204, %v1491
    %v1493 = vpop.f32.mrb[0].mxu0
    %1494 = vdwg.mxu0
    %1495 = vmatprep.subr.bf16.mxu0 0
    %1496 = vmatpush1.bf16.msra.mxu0 %v1350
    %1497 = vmatprep.subr.bf16.mxu0 0
    %1498 = vmatpush1.bf16.msra.mxu0 %v1351
    %1499 = vmatprep.subr.bf16.mxu0 0
    %1500 = vmatpush1.bf16.msra.mxu0 %v1352
    %1501 = vmatprep.subr.bf16.mxu0 0
    %1502 = vmatpush1.bf16.msra.mxu0 %v1353
    %1503 = vmatprep.subr.bf16.mxu0 0
    %1504 = vmatpush1.bf16.msra.mxu0 %v1354
    %1505 = vmatprep.subr.bf16.mxu0 0
    %1506 = vmatpush1.bf16.msra.mxu0 %v1355
    %1507 = vmatprep.subr.bf16.mxu0 0
    %1508 = vmatpush1.bf16.msra.mxu0 %v1356
    %1509 = vmatprep.subr.bf16.mxu0 0
    %1510 = vmatpush1.bf16.msra.mxu0 %v1357
    %1511 = vmatprep.subr.bf16.mxu0 0
    %1512 = vmatpush1.bf16.msra.mxu0 %v1358
    %1513 = vmatprep.subr.bf16.mxu0 0
    %1514 = vmatpush1.bf16.msra.mxu0 %v1359
    %1515 = vmatprep.subr.bf16.mxu0 0
    %1516 = vmatpush1.bf16.msra.mxu0 %v1360
    %1517 = vmatprep.subr.bf16.mxu0 0
    %1518 = vmatpush1.bf16.msra.mxu0 %v1361
    %1519 = vmatprep.subr.bf16.mxu0 0
    %1520 = vmatpush1.bf16.msra.mxu0 %v1362
    %1521 = vmatprep.subr.bf16.mxu0 0
    %1522 = vmatpush1.bf16.msra.mxu0 %v1363
    %1523 = vmatprep.subr.bf16.mxu0 0
    %1524 = vmatpush1.bf16.msra.mxu0 %v1364
    %1525 = vmatprep.subr.bf16.mxu0 0
    %1526 = vmatpush1.bf16.msra.mxu0 %v1365
    %1527 = vmatprep.mubr.bf16.mxu0 %v1106
    %1528 = vmatmul.mubr.bf16.gmra.mrb[0].mxu0 %v1105
    %v1529 = vpop.f32.mrb[0].mxu0
    %v1530 = vadd.f32 %v1433, %v1529
    %v1531 = vpop.f32.mrb[0].mxu0
    %v1532 = vpop.f32.mrb[0].mxu0
    %v1533 = vadd.f32 %v1436, %v1532
    %v1534 = vpop.f32.mrb[0].mxu0
    %1535 = vmatprep.mubr.bf16.mxu0 %v1110
    %1536 = vmatmul.mubr.bf16.gmra.mrb[0].mxu0 %v1109
    %v1537 = vpop.f32.mrb[0].mxu0
    %v1538 = vadd.f32 %v1441, %v1537
    %v1539 = vpop.f32.mrb[0].mxu0
    %v1540 = vpop.f32.mrb[0].mxu0
    %v1541 = vadd.f32 %v1444, %v1540
    %v1542 = vpop.f32.mrb[0].mxu0
    %1543 = vmatprep.mubr.bf16.mxu0 %v1114
    %1544 = vmatmul.mubr.bf16.gmra.mrb[0].mxu0 %v1113
    %v1545 = vpop.f32.mrb[0].mxu0
    %v1546 = vadd.f32 %v1449, %v1545
    %v1547 = vpop.f32.mrb[0].mxu0
    %v1548 = vpop.f32.mrb[0].mxu0
    %v1549 = vadd.f32 %v1452, %v1548
    %v1550 = vpop.f32.mrb[0].mxu0
    %1551 = vmatprep.mubr.bf16.mxu0 %v1118
    %1552 = vmatmul.mubr.bf16.gmra.mrb[0].mxu0 %v1117
    %v1553 = vpop.f32.mrb[0].mxu0
    %v1554 = vadd.f32 %v1457, %v1553
    %v1555 = vpop.f32.mrb[0].mxu0
    %v1556 = vpop.f32.mrb[0].mxu0
    %v1557 = vadd.f32 %v1460, %v1556
    %v1558 = vpop.f32.mrb[0].mxu0
    %1559 = vmatprep.mubr.bf16.mxu0 %v1122
    %1560 = vmatmul.mubr.bf16.gmra.mrb[0].mxu0 %v1121
    %v1561 = vpop.f32.mrb[0].mxu0
    %v1562 = vadd.f32 %v1465, %v1561
    %v1563 = vpop.f32.mrb[0].mxu0
    %v1564 = vpop.f32.mrb[0].mxu0
    %v1565 = vadd.f32 %v1468, %v1564
    %v1566 = vpop.f32.mrb[0].mxu0
    %1567 = vmatprep.mubr.bf16.mxu0 %v1126
    %1568 = vmatmul.mubr.bf16.gmra.mrb[0].mxu0 %v1125
    %v1569 = vpop.f32.mrb[0].mxu0
    %v1570 = vadd.f32 %v1473, %v1569
    %v1571 = vpop.f32.mrb[0].mxu0
    %v1572 = vpop.f32.mrb[0].mxu0
    %v1573 = vadd.f32 %v1476, %v1572
    %v1574 = vpop.f32.mrb[0].mxu0
    %1575 = vmatprep.mubr.bf16.mxu0 %v1130
    %1576 = vmatmul.mubr.bf16.gmra.mrb[0].mxu0 %v1129
    %v1577 = vpop.f32.mrb[0].mxu0
    %v1578 = vadd.f32 %v1481, %v1577
    %v1579 = vpop.f32.mrb[0].mxu0
    %v1580 = vpop.f32.mrb[0].mxu0
    %v1581 = vadd.f32 %v1484, %v1580
    %v1582 = vpop.f32.mrb[0].mxu0
    %1583 = vmatprep.mubr.bf16.mxu0 %v1134
    %1584 = vmatmul.mubr.bf16.gmra.mrb[0].mxu0 %v1133
    %v1585 = vpop.f32.mrb[0].mxu0
    %v1586 = vadd.f32 %v1489, %v1585
    %v1587 = vpop.f32.mrb[0].mxu0
    %v1588 = vpop.f32.mrb[0].mxu0
    %v1589 = vadd.f32 %v1492, %v1588
    %v1590 = vpop.f32.mrb[0].mxu0
    %1591 = vdwg.mxu0
    %1592 = vst [vmem:[#allocation8] sm:$0xff] %v1530
    %1593 = vst [vmem:[#allocation8 + $0x8] sm:$0xff] %v1533
    %1594 = vst [vmem:[#allocation8 + $0x10] sm:$0xff] %v1538
    %1595 = vst [vmem:[#allocation8 + $0x18] sm:$0xff] %v1541
    %1596 = vst [vmem:[#allocation8 + $0x20] sm:$0xff] %v1546
    %1597 = vst [vmem:[#allocation8 + $0x28] sm:$0xff] %v1549
    %1598 = vst [vmem:[#allocation8 + $0x30] sm:$0xff] %v1554
    %1599 = vst [vmem:[#allocation8 + $0x38] sm:$0xff] %v1557
    %1600 = vst [vmem:[#allocation8 + $0x40] sm:$0xff] %v1562
    %1601 = vst [vmem:[#allocation8 + $0x48] sm:$0xff] %v1565
    %1602 = vst [vmem:[#allocation8 + $0x50] sm:$0xff] %v1570
    %1603 = vst [vmem:[#allocation8 + $0x58] sm:$0xff] %v1573
    %1604 = vst [vmem:[#allocation8 + $0x60] sm:$0xff] %v1578
    %1605 = vst [vmem:[#allocation8 + $0x68] sm:$0xff] %v1581
    %1606 = vst [vmem:[#allocation8 + $0x70] sm:$0xff] %v1586
    %1607 = vst [vmem:[#allocation8 + $0x78] sm:$0xff] %v1589
    // Predicated region
    $region34: #{expert_forward.1} parent=1 // pred_check
      _
    $region35: #{expert_forward.1} parent=1 // pred_check_branch
      %1609 = sbr.rel (0) target = $region37
    $region36: #{expert_forward.1} parent=1 // pred_region
      %s1611 = ssub.s32 2048, 2048
      %1612 = vsyncadd [#allocation4], %s1611
      %s1613 = sshll.u32 [#allocation8], 4
      %s1614 = int_to_ptr.vmem [resolvable:$true] %s1613
      %1619 = dma.vmem_to_hbm [thread:$0]  %s1614, 2048, %s5, [#allocation4], 128, 128, 8
    $region37: #{expert_forward.1} parent=1 // pred_fallthru
      _
    // Predicated region
    $region38: #{expert_forward.1} parent=1 // pred_check
      _
    $region39: #{expert_forward.1} parent=1 // pred_check_branch
      %1621 = sbr.rel (0) target = $region41
    $region40: #{expert_forward.1} parent=1 // pred_region
      %1622 = dma.done [#allocation4], 2048
    $region41: #{expert_forward.1} parent=1 // pred_fallthru
      _
    %1623 = vsyncpa [#allocation3], 1
    %1624 = vsyncpa [#allocation6], 1
    %1625 = vsyncpa [#allocation4], 1

</llo_original>
